<compile_context>
chip_gen: v7x
topology: tpu7x:2x2x1
jax: 0.10.0
libtpu: 0.0.40
codegen_flags: <defaults>
</compile_context>

<pallas_src>
import functools
import math

import jax
import jax.numpy as jnp
import numpy as np
from jax import lax
from jax.experimental import pallas as pl
from jax.experimental.pallas import tpu as pltpu


def _cdiv(a, b):
    return -(-a // b)


def _round_up(a, b):
    return _cdiv(a, b) * b


def _halo_lanes(TH, Wq, *, KH, KW, stride, dilation):
    """Lanes (rounded up to whole rows) needed past the main block per tile."""
    l_out = TH * Wq
    main_l = l_out * stride
    span = (l_out - 1) * stride + 1
    need = dilation * ((KH - 1) * Wq + (KW - 1)) + span
    halo_exact = max(need - main_l, 0)
    halo_rows = max(_cdiv(halo_exact, Wq), 1)
    return halo_rows * Wq, halo_rows


def _sepconv_kernel(xm_ref, xh_ref, w_ref, o_ref, slab_ref, *,
                    KH, KW, stride, dilation, Wq, main_l, halo_l, l_out):
    """One (batch, row-tile) block per grid step.

    xm_ref : (Cin, main_l)        main flattened input chunk (non-overlapping)
    xh_ref : (Cin, halo_l)        halo lanes immediately following the main chunk
    w_ref  : (KH*KW, Cout, Cin)   fused per-tap weights  w_eff[k] = pw * dw[:, k]
    o_ref  : (Cout, l_out)        flattened output tile (lane-dense)
    slab_ref: VMEM scratch (Cin, main_l + halo_l)
    """
    # Assemble the contiguous input slab (main + halo) once in VMEM.
    slab_ref[:, pl.ds(0, main_l)] = xm_ref[...]
    slab_ref[:, pl.ds(main_l, halo_l)] = xh_ref[...]

    w_all = w_ref[...]                                   # hoisted: loaded once per step
    cout = o_ref.shape[0]
    acc = jnp.zeros((cout, l_out), dtype=jnp.float32)

    # Depthwise + pointwise fused: one small-K MXU matmul per tap, f32 accumulation.
    for kh in range(KH):
        for kw in range(KW):
            off = dilation * (kh * Wq + kw)
            if stride == 1:
                tap = slab_ref[:, pl.ds(off, l_out)]
            else:
                # TODO(synk): lane-strided reads (stride>1) are correct but may be slow.
                tap = slab_ref[:, pl.ds(off, l_out, stride)]
            acc = acc + jnp.dot(w_all[kh * KW + kw], tap,
                                preferred_element_type=jnp.float32)

    o_ref[...] = acc.astype(o_ref.dtype)


def separable_conv2d(x, dw_weight, pw_weight, *, stride=1, padding=0, dilation=1,
                     block_rows=None):
    """Forward pass of SeparableConv2d (bias=False).

    x        : (N, Cin, H, W)      NCHW activations
    dw_weight: (Cin, 1, KH, KW)    PyTorch depthwise conv weight layout
    pw_weight: (Cout, Cin, 1, 1)   PyTorch pointwise (1x1) conv weight layout
    returns  : (N, Cout, H_out, W_out)
    """
    N, Cin, H, W = (int(d) for d in x.shape)
    KH, KW = int(dw_weight.shape[2]), int(dw_weight.shape[3])
    Cout = int(pw_weight.shape[0])

    H_out = (H + 2 * padding - dilation * (KH - 1) - 1) // stride + 1
    W_out = (W + 2 * padding - dilation * (KW - 1) - 1) // stride + 1
    assert H_out > 0 and W_out > 0, "empty output"
    Wp = W + 2 * padding
    itemsize = jnp.dtype(x.dtype).itemsize

    # ---- generation-aware VMEM budget (64 MiB/TC on v7x, 128 MiB on v5e/v6e) ----
    try:
        vmem_cap = int(pltpu.get_tpu_info().vmem_capacity_bytes)
    except Exception:  # no/unknown TPU info -> assume the v7x floor
        vmem_cap = 64 * 1024 * 1024
    budget = max(2 * 1024 * 1024, int(vmem_cap * 0.40))

    def tile_bytes(TH, Wq):
        l_out = TH * Wq
        main_l = l_out * stride
        halo_lp, _ = _halo_lanes(TH, Wq, KH=KH, KW=KW, stride=stride, dilation=dilation)
        blocks = Cin * (main_l + halo_lp) + Cout * l_out          # one buffer set
        weights = KH * KW * Cout * Cin
        slab = Cin * (main_l + halo_lp)
        f32_tmp = (2 * Cout + 2 * Cin) * l_out                    # acc + matmul result + tap
        return (2 * blocks + weights + slab) * itemsize + f32_tmp * 4

    def make_candidate(TH):
        TH = max(1, min(int(TH), H_out))
        n_ht = _cdiv(H_out, TH)
        if n_ht == 1:
            Wq = Wp                                  # block == full dim, no alignment needed
        else:
            # Need TH*Wq % 128 == 0 so the blocked lane dim is 128-aligned.
            Wq = _round_up(Wp, 128 // math.gcd(128, TH))
        return TH, n_ht, Wq

    if block_rows is not None:
        TH, n_ht, Wq = make_candidate(block_rows)
    else:
        cands, seen = [], set()
        for c in range(1, H_out + 1):
            TH_c = _cdiv(H_out, c)
            if TH_c in seen:
                continue
            seen.add(TH_c)
            cands.append(make_candidate(TH_c))
        fitting = [c for c in cands if tile_bytes(c[0], c[2]) <= budget]
        pool = fitting if fitting else [min(cands, key=lambda c: tile_bytes(c[0], c[2]))]

        def score(c):
            TH_c, n_ht_c, Wq_c = c
            lanes = TH_c * Wq_c
            waste = (n_ht_c * TH_c * Wq_c) / float(H_out * Wp)   # padded work / useful work
            return (0 if lanes >= 512 else 1, round(waste, 3), n_ht_c)

        TH, n_ht, Wq = min(pool, key=score)

    RB = TH * stride                                   # input rows consumed per tile (no overlap)
    L_out = TH * Wq
    MAIN_L = RB * Wq
    HALO_Lp, halo_rows = _halo_lanes(TH, Wq, KH=KH, KW=KW, stride=stride, dilation=dilation)
    rows_main = n_ht * RB
    H_out_pad = n_ht * TH

    zero = jnp.zeros((), dtype=x.dtype)

    # ---- main input: single pad/crop to (N, Cin, rows_main, Wq) (the conv padding pass we
    # need anyway), then a FREE row-major reshape to (N, Cin, rows_main*Wq).  No halo
    # duplication, no activation transposes. ----
    x_main = lax.pad(
        x, zero,
        ((0, 0, 0), (0, 0, 0),
         (padding, rows_main - padding - H, 0),        # negative high pad = crop
         (padding, Wq - padding - W, 0)))
    x_main = x_main.reshape(N, Cin, rows_main * Wq)

    # ---- halo side-array: the few rows each tile needs from its successor (plus the
    # tap tail), gathered directly from x.  Size ~ halo_rows/TH of the input. ----
    t_idx = np.arange(n_ht, dtype=np.int32)
    r_idx = np.arange(halo_rows, dtype=np.int32)
    rows_pad = (t_idx[:, None] + 1) * RB + r_idx[None, :]          # padded-coordinate rows
    rows_orig = rows_pad.reshape(-1) - padding
    valid = jnp.asarray((rows_orig >= 0) & (rows_orig < H))
    rows_clip = jnp.asarray(np.clip(rows_orig, 0, H - 1).astype(np.int32))
    halo = jnp.take(x, rows_clip, axis=2)                           # (N, Cin, n_ht*halo_rows, W)
    halo = jnp.where(valid[None, None, :, None], halo, zero)
    halo = lax.pad(halo, zero,
                   ((0, 0, 0), (0, 0, 0), (0, 0, 0),
                    (padding, Wq - padding - W, 0)))                # pad width to Wq
    halo = halo.reshape(N, Cin, n_ht, halo_rows * Wq)               # free contiguous reshape
    halo = jnp.transpose(halo, (0, 2, 1, 3))                        # small (halo-sized) copy only

    # ---- fused per-tap weights: w_eff[k] = pw * dw[:, k]  -> (KH*KW, Cout, Cin) ----
    dw = dw_weight[:, 0, :, :].reshape(Cin, KH * KW).astype(jnp.float32)
    pw = pw_weight[:, :, 0, 0].astype(jnp.float32)
    w_eff = (pw[None, :, :] * jnp.transpose(dw)[:, None, :]).astype(x.dtype)

    kernel = functools.partial(
        _sepconv_kernel, KH=KH, KW=KW, stride=stride, dilation=dilation,
        Wq=Wq, main_l=MAIN_L, halo_l=HALO_Lp, l_out=L_out)

    need = tile_bytes(TH, Wq)
    # Never below the platform scoped default (32 MiB covers all gens), never past ~3/4 of VMEM.
    vmem_limit = int(min(max(32 * 1024 * 1024, need + 16 * 1024 * 1024),
                         (vmem_cap * 3) // 4))
    vmem_limit = max(vmem_limit, 32 * 1024 * 1024)

    out = pl.pallas_call(
        kernel,
        out_shape=jax.ShapeDtypeStruct((N, Cout, n_ht * L_out), x.dtype),
        grid_spec=pltpu.PrefetchScalarGridSpec(
            num_scalar_prefetch=0,
            grid=(N, n_ht),
            in_specs=[
                pl.BlockSpec((None, Cin, MAIN_L), lambda n, t: (n, 0, t)),
                pl.BlockSpec((None, None, Cin, HALO_Lp), lambda n, t: (n, t, 0, 0)),
                pl.BlockSpec((KH * KW, Cout, Cin), lambda n, t: (0, 0, 0)),
            ],
            out_specs=pl.BlockSpec((None, Cout, L_out), lambda n, t: (n, 0, t)),
            scratch_shapes=[pltpu.VMEM((Cin, MAIN_L + HALO_Lp), x.dtype)],
        ),
        compiler_params=pltpu.CompilerParams(
            dimension_semantics=("parallel", "parallel"),   # megacore-shardable on v7x
            vmem_limit_bytes=vmem_limit),
    )(x_main, halo, w_eff)

    # Free reshape (row-major) + strip of padded rows / garbage columns.
    out = out.reshape(N, Cout, H_out_pad, Wq)
    return out[:, :, :H_out, :W_out]


def _reference(x_nchw, dw_weight, pw_weight, *, stride, padding, dilation):
    """Pure-JAX reference (mirrors nn.Conv2d semantics)."""
    Cin = x_nchw.shape[1]
    dn = lax.conv_dimension_numbers(x_nchw.shape, dw_weight.shape,
                                    ("NCHW", "OIHW", "NCHW"))
    y = lax.conv_general_dilated(
        x_nchw, dw_weight, window_strides=(stride, stride),
        padding=((padding, padding), (padding, padding)),
        rhs_dilation=(dilation, dilation),
        dimension_numbers=dn, feature_group_count=Cin)
    dn2 = lax.conv_dimension_numbers(y.shape, pw_weight.shape,
                                     ("NCHW", "OIHW", "NCHW"))
    return lax.conv_general_dilated(
        y, pw_weight, window_strides=(1, 1), padding="VALID",
        dimension_numbers=dn2)


if __name__ == "__main__":
    def run_case(N, Cin, Cout, H, W, K, stride, padding, dilation, block_rows, key):
        kx, kd, kp = jax.random.split(key, 3)
        x = jax.random.normal(kx, (N, Cin, H, W), dtype=jnp.float32)
        dw = jax.random.normal(kd, (Cin, 1, K, K), dtype=jnp.float32) * 0.1
        pw = jax.random.normal(kp, (Cout, Cin, 1, 1), dtype=jnp.float32) * 0.1
        fwd = jax.jit(functools.partial(separable_conv2d, stride=stride,
                                        padding=padding, dilation=dilation,
                                        block_rows=block_rows))
        out = jax.block_until_ready(fwd(x, dw, pw))
        ref = _reference(x, dw, pw, stride=stride, padding=padding, dilation=dilation)
        assert out.shape == ref.shape, (out.shape, ref.shape)
        assert jnp.allclose(out, ref, atol=1e-4, rtol=1e-4), (
            f"mismatch vs reference (max err "
            f"{float(jnp.max(jnp.abs(out - ref))):.3e})")

    keys = jax.random.split(jax.random.PRNGKey(0), 3)
    # 1) base config (batch=2, Cin=4, Cout=8, 16x16, 3x3, pad=1) - auto tiling (single tile).
    run_case(2, 4, 8, 16, 16, 3, 1, 1, 1, None, keys[0])
    # 2) forced multi-tile path: 128-aligned lane blocks + cross-tile halo.
    run_case(2, 4, 8, 16, 16, 3, 1, 1, 1, 4, keys[1])
    # 3) awkward spatial size + dilation: H_out padding + dilated taps.
    run_case(2, 4, 8, 15, 15, 3, 1, 2, 2, 4, keys[2])

    print("KERNEL_OK")
</pallas_src>

<mosaic_0001>
module attributes {stable_mosaic.version = 11 : i64} {
  func.func @_sepconv_kernel(%arg0: i32, %arg1: i32, %arg2: memref<1x4x288xf32, #tpu.memory_space<vmem>>, %arg3: memref<1x1x4x54xf32, #tpu.memory_space<vmem>>, %arg4: memref<9x8x4xf32, #tpu.memory_space<vmem>>, %arg5: memref<1x8x288xf32, #tpu.memory_space<vmem>>, %arg6: memref<4x342xf32, #tpu.memory_space<vmem>>) attributes {dimension_semantics = [#tpu.dimension_semantics<parallel>, #tpu.dimension_semantics<parallel>], iteration_bounds = array<i64: 2, 1>, scalar_prefetch = 0 : i64, scratch_operands = 1 : i64, tpu.core_type = #tpu.core_type<tc>, window_params = [{transform_indices = @transform_0, window_bounds = array<i64: 1, 4, 288>}, {transform_indices = @transform_1, window_bounds = array<i64: 1, 1, 4, 54>}, {pipeline_mode = #tpu.pipeline_mode<synchronous>, transform_indices = @transform_2, window_bounds = array<i64: 9, 8, 4>}, {transform_indices = @transform_3, window_bounds = array<i64: 1, 8, 288>}]} {
    %c0 = arith.constant 0 : index
    %c0_0 = arith.constant 0 : index
    %c0_1 = arith.constant 0 : index
    %0 = vector.load %arg2[%c0, %c0_0, %c0_1] : memref<1x4x288xf32, #tpu.memory_space<vmem>>, vector<1x4x288xf32>
    %1 = vector.shape_cast %0 : vector<1x4x288xf32> to vector<4x288xf32>
    %c0_2 = arith.constant 0 : index
    %c0_3 = arith.constant 0 : index
    %2 = vector.load %arg6[%c0_2, %c0_3] : memref<4x342xf32, #tpu.memory_space<vmem>>, vector<4x288xf32>
    tpu.vector_store %arg6[%c0_2, %c0_3], %1 {strides = array<i32>} : memref<4x342xf32, #tpu.memory_space<vmem>>, vector<4x288xf32>,
    %c0_4 = arith.constant 0 : index
    %c0_5 = arith.constant 0 : index
    %c0_6 = arith.constant 0 : index
    %c0_7 = arith.constant 0 : index
    %3 = vector.load %arg3[%c0_4, %c0_5, %c0_6, %c0_7] : memref<1x1x4x54xf32, #tpu.memory_space<vmem>>, vector<1x1x4x54xf32>
    %4 = vector.shape_cast %3 : vector<1x1x4x54xf32> to vector<4x54xf32>
    %c0_8 = arith.constant 0 : index
    %c288 = arith.constant 288 : index
    %5 = vector.load %arg6[%c0_8, %c288] : memref<4x342xf32, #tpu.memory_space<vmem>>, vector<4x54xf32>
    tpu.vector_store %arg6[%c0_8, %c288], %4 {strides = array<i32>} : memref<4x342xf32, #tpu.memory_space<vmem>>, vector<4x54xf32>,
    %c0_9 = arith.constant 0 : index
    %c0_10 = arith.constant 0 : index
    %c0_11 = arith.constant 0 : index
    %6 = vector.load %arg4[%c0_9, %c0_10, %c0_11] : memref<9x8x4xf32, #tpu.memory_space<vmem>>, vector<9x8x4xf32>
    %cst = arith.constant 0.000000e+00 : f32
    %7 = vector.broadcast %cst : f32 to vector<8x288xf32>
    %c0_12 = arith.constant 0 : index
    %c0_13 = arith.constant 0 : index
    %8 = vector.load %arg6[%c0_12, %c0_13] : memref<4x342xf32, #tpu.memory_space<vmem>>, vector<4x288xf32>
    %9 = vector.extract_strided_slice %6 {offsets = [0, 0, 0], sizes = [1, 8, 4], strides = [1, 1, 1]} : vector<9x8x4xf32> to vector<1x8x4xf32>
    %10 = vector.shape_cast %9 : vector<1x8x4xf32> to vector<8x4xf32>
    %cst_14 = arith.constant dense<0.000000e+00> : vector<8x288xf32>
    %11 = tpu.matmul %10, %8, %cst_14 {dimension_numbers = #tpu.dot_dimension_numbers<[1], [0], [0], [1], [0, 0, 1, 1], [], []>} : vector<8x4xf32>, vector<4x288xf32>, vector<8x288xf32> -> vector<8x288xf32>
    %12 = arith.addf %7, %11 : vector<8x288xf32>
    %c0_15 = arith.constant 0 : index
    %c1 = arith.constant 1 : index
    %13 = vector.load %arg6[%c0_15, %c1] : memref<4x342xf32, #tpu.memory_space<vmem>>, vector<4x288xf32>
    %14 = vector.extract_strided_slice %6 {offsets = [1, 0, 0], sizes = [1, 8, 4], strides = [1, 1, 1]} : vector<9x8x4xf32> to vector<1x8x4xf32>
    %15 = vector.shape_cast %14 : vector<1x8x4xf32> to vector<8x4xf32>
    %cst_16 = arith.constant dense<0.000000e+00> : vector<8x288xf32>
    %16 = tpu.matmul %15, %13, %cst_16 {dimension_numbers = #tpu.dot_dimension_numbers<[1], [0], [0], [1], [0, 0, 1, 1], [], []>} : vector<8x4xf32>, vector<4x288xf32>, vector<8x288xf32> -> vector<8x288xf32>
    %17 = arith.addf %12, %16 : vector<8x288xf32>
    %c0_17 = arith.constant 0 : index
    %c2 = arith.constant 2 : index
    %18 = vector.load %arg6[%c0_17, %c2] : memref<4x342xf32, #tpu.memory_space<vmem>>, vector<4x288xf32>
    %19 = vector.extract_strided_slice %6 {offsets = [2, 0, 0], sizes = [1, 8, 4], strides = [1, 1, 1]} : vector<9x8x4xf32> to vector<1x8x4xf32>
    %20 = vector.shape_cast %19 : vector<1x8x4xf32> to vector<8x4xf32>
    %cst_18 = arith.constant dense<0.000000e+00> : vector<8x288xf32>
    %21 = tpu.matmul %20, %18, %cst_18 {dimension_numbers = #tpu.dot_dimension_numbers<[1], [0], [0], [1], [0, 0, 1, 1], [], []>} : vector<8x4xf32>, vector<4x288xf32>, vector<8x288xf32> -> vector<8x288xf32>
    %22 = arith.addf %17, %21 : vector<8x288xf32>
    %c0_19 = arith.constant 0 : index
    %c18 = arith.constant 18 : index
    %23 = vector.load %arg6[%c0_19, %c18] : memref<4x342xf32, #tpu.memory_space<vmem>>, vector<4x288xf32>
    %24 = vector.extract_strided_slice %6 {offsets = [3, 0, 0], sizes = [1, 8, 4], strides = [1, 1, 1]} : vector<9x8x4xf32> to vector<1x8x4xf32>
    %25 = vector.shape_cast %24 : vector<1x8x4xf32> to vector<8x4xf32>
    %cst_20 = arith.constant dense<0.000000e+00> : vector<8x288xf32>
    %26 = tpu.matmul %25, %23, %cst_20 {dimension_numbers = #tpu.dot_dimension_numbers<[1], [0], [0], [1], [0, 0, 1, 1], [], []>} : vector<8x4xf32>, vector<4x288xf32>, vector<8x288xf32> -> vector<8x288xf32>
    %27 = arith.addf %22, %26 : vector<8x288xf32>
    %c0_21 = arith.constant 0 : index
    %c19 = arith.constant 19 : index
    %28 = vector.load %arg6[%c0_21, %c19] : memref<4x342xf32, #tpu.memory_space<vmem>>, vector<4x288xf32>
    %29 = vector.extract_strided_slice %6 {offsets = [4, 0, 0], sizes = [1, 8, 4], strides = [1, 1, 1]} : vector<9x8x4xf32> to vector<1x8x4xf32>
    %30 = vector.shape_cast %29 : vector<1x8x4xf32> to vector<8x4xf32>
    %cst_22 = arith.constant dense<0.000000e+00> : vector<8x288xf32>
    %31 = tpu.matmul %30, %28, %cst_22 {dimension_numbers = #tpu.dot_dimension_numbers<[1], [0], [0], [1], [0, 0, 1, 1], [], []>} : vector<8x4xf32>, vector<4x288xf32>, vector<8x288xf32> -> vector<8x288xf32>
    %32 = arith.addf %27, %31 : vector<8x288xf32>
    %c0_23 = arith.constant 0 : index
    %c20 = arith.constant 20 : index
    %33 = vector.load %arg6[%c0_23, %c20] : memref<4x342xf32, #tpu.memory_space<vmem>>, vector<4x288xf32>
    %34 = vector.extract_strided_slice %6 {offsets = [5, 0, 0], sizes = [1, 8, 4], strides = [1, 1, 1]} : vector<9x8x4xf32> to vector<1x8x4xf32>
    %35 = vector.shape_cast %34 : vector<1x8x4xf32> to vector<8x4xf32>
    %cst_24 = arith.constant dense<0.000000e+00> : vector<8x288xf32>
    %36 = tpu.matmul %35, %33, %cst_24 {dimension_numbers = #tpu.dot_dimension_numbers<[1], [0], [0], [1], [0, 0, 1, 1], [], []>} : vector<8x4xf32>, vector<4x288xf32>, vector<8x288xf32> -> vector<8x288xf32>
    %37 = arith.addf %32, %36 : vector<8x288xf32>
    %c0_25 = arith.constant 0 : index
    %c36 = arith.constant 36 : index
    %38 = vector.load %arg6[%c0_25, %c36] : memref<4x342xf32, #tpu.memory_space<vmem>>, vector<4x288xf32>
    %39 = vector.extract_strided_slice %6 {offsets = [6, 0, 0], sizes = [1, 8, 4], strides = [1, 1, 1]} : vector<9x8x4xf32> to vector<1x8x4xf32>
    %40 = vector.shape_cast %39 : vector<1x8x4xf32> to vector<8x4xf32>
    %cst_26 = arith.constant dense<0.000000e+00> : vector<8x288xf32>
    %41 = tpu.matmul %40, %38, %cst_26 {dimension_numbers = #tpu.dot_dimension_numbers<[1], [0], [0], [1], [0, 0, 1, 1], [], []>} : vector<8x4xf32>, vector<4x288xf32>, vector<8x288xf32> -> vector<8x288xf32>
    %42 = arith.addf %37, %41 : vector<8x288xf32>
    %c0_27 = arith.constant 0 : index
    %c37 = arith.constant 37 : index
    %43 = vector.load %arg6[%c0_27, %c37] : memref<4x342xf32, #tpu.memory_space<vmem>>, vector<4x288xf32>
    %44 = vector.extract_strided_slice %6 {offsets = [7, 0, 0], sizes = [1, 8, 4], strides = [1, 1, 1]} : vector<9x8x4xf32> to vector<1x8x4xf32>
    %45 = vector.shape_cast %44 : vector<1x8x4xf32> to vector<8x4xf32>
    %cst_28 = arith.constant dense<0.000000e+00> : vector<8x288xf32>
    %46 = tpu.matmul %45, %43, %cst_28 {dimension_numbers = #tpu.dot_dimension_numbers<[1], [0], [0], [1], [0, 0, 1, 1], [], []>} : vector<8x4xf32>, vector<4x288xf32>, vector<8x288xf32> -> vector<8x288xf32>
    %47 = arith.addf %42, %46 : vector<8x288xf32>
    %c0_29 = arith.constant 0 : index
    %c38 = arith.constant 38 : index
    %48 = vector.load %arg6[%c0_29, %c38] : memref<4x342xf32, #tpu.memory_space<vmem>>, vector<4x288xf32>
    %49 = vector.extract_strided_slice %6 {offsets = [8, 0, 0], sizes = [1, 8, 4], strides = [1, 1, 1]} : vector<9x8x4xf32> to vector<1x8x4xf32>
    %50 = vector.shape_cast %49 : vector<1x8x4xf32> to vector<8x4xf32>
    %cst_30 = arith.constant dense<0.000000e+00> : vector<8x288xf32>
    %51 = tpu.matmul %50, %48, %cst_30 {dimension_numbers = #tpu.dot_dimension_numbers<[1], [0], [0], [1], [0, 0, 1, 1], [], []>} : vector<8x4xf32>, vector<4x288xf32>, vector<8x288xf32> -> vector<8x288xf32>
    %52 = arith.addf %47, %51 : vector<8x288xf32>
    %c0_31 = arith.constant 0 : index
    %c0_32 = arith.constant 0 : index
    %c0_33 = arith.constant 0 : index
    %53 = vector.load %arg5[%c0_31, %c0_32, %c0_33] : memref<1x8x288xf32, #tpu.memory_space<vmem>>, vector<1x8x288xf32>
    %54 = vector.shape_cast %53 : vector<1x8x288xf32> to vector<8x288xf32>
    %55 = vector.shape_cast %52 : vector<8x288xf32> to vector<1x8x288xf32>
    tpu.vector_store %arg5[%c0_31, %c0_32, %c0_33], %55 {strides = array<i32>} : memref<1x8x288xf32, #tpu.memory_space<vmem>>, vector<1x8x288xf32>,
    return
  }
  func.func @transform_0(%arg0: i32, %arg1: i32) -> (i32, i32, i32) {
    %c0_i32 = arith.constant 0 : i32
    %c0_i32_0 = arith.constant 0 : i32
    return %arg0, %c0_i32, %arg1 : i32, i32, i32
  }
  func.func @transform_1(%arg0: i32, %arg1: i32) -> (i32, i32, i32, i32) {
    %c0_i32 = arith.constant 0 : i32
    %c0_i32_0 = arith.constant 0 : i32
    %c0_i32_1 = arith.constant 0 : i32
    return %arg0, %arg1, %c0_i32, %c0_i32_0 : i32, i32, i32, i32
  }
  func.func @transform_2(%arg0: i32, %arg1: i32) -> (i32, i32, i32) {
    %c0_i32 = arith.constant 0 : i32
    %c0_i32_0 = arith.constant 0 : i32
    %c0_i32_1 = arith.constant 0 : i32
    %c0_i32_2 = arith.constant 0 : i32
    return %c0_i32, %c0_i32_0, %c0_i32_1 : i32, i32, i32
  }
  func.func @transform_3(%arg0: i32, %arg1: i32) -> (i32, i32, i32) {
    %c0_i32 = arith.constant 0 : i32
    %c0_i32_0 = arith.constant 0 : i32
    return %arg0, %c0_i32, %arg1 : i32, i32, i32
  }
}

</mosaic_0001>

<llo_original>
// kernel: separable_conv2d.1
$region0: #{separable_conv2d.1}
  #allocation0 [shape = 'u32[]', space=smem, size = 0x4, offset = 0x4, fixed_abs, tag = 'smem constant byte address 0x4 - core index']
  #allocation1 [shape = 'u32[144,128]{1,0:T(1,128)}', space=vmem, size = 0x12000, scoped, tag = 'internal scratch']
  #allocation2 [shape = 'f32[4,342]{1,0:T(4,128)}', space=vmem, size = 0x1800, scoped, tag = 'scratch operand']
  %s0 = inlined_call_operand.vmem [shape: f32[2,4,288], index: 0, kind: input, shape index: {}]
  %s1 = inlined_call_operand.vmem [shape: f32[2,1,4,54], index: 1, kind: input, shape index: {}]
  %s2 = inlined_call_operand.vmem [shape: f32[9,8,4], index: 2, kind: input, shape index: {}]
  %s3 = inlined_call_operand.vmem [shape: f32[2,8,288], index: 3, kind: output, shape index: {}]
  %s4 = sld [smem:[#allocation0]]
  $region45: #{separable_conv2d.1} parent=0
    _
  %s6 = ssub.s32 1, %s4
  %s7 = scalar_select 0, %s6, %s4
  loop: start=0, step=1, limit=4
  $region2: #{separable_conv2d.1} parent=0 // loop_pre_header
    _
  $region3: #{separable_conv2d.1} parent=0 // loop_header
    %s9 = sphi 0, %s13
    %p10 = scmp.ge.s32.totalorder %s9, 4
    %s16 = sphi 0, %s28
    %s17 = sphi 0, %s24
    %s18 = sphi 0, %s16
    %s19 = sphi 0, %s17
    %s20 = sphi 0, %s18
    %s21 = sphi 0, %s19
    %s33 = sphi 0, %s35
    %s36 = sphi 0, %s33
    %s37 = sphi 0, %s36
    %s53 = sphi 0, %s37
    %s61 = sphi 0, %s63
    %s64 = sphi 0, %s61
    %s65 = sphi 0, %s64
    %s81 = sphi 0, %s65
    %s85 = sphi 0, %s85
    %s87 = sphi 0, %s85
    %s88 = sphi 0, %s87
    %s102 = sphi 0, %s88
    %s110 = sphi 0, %s112
    %s113 = sphi 0, %s110
    %s114 = sphi 0, %s113
    %s130 = sphi 0, %s114
  $region4: #{separable_conv2d.1} parent=0 // loop_header_branch
    %12 = sbr.rel (%p10) target = $region8
  $region5: #{separable_conv2d.1} parent=0 // loop_body
    %s14 = ssub.s32 %s9, 1
    %s15 = ssub.s32 %s9, 2
    %s22 = sadd.s32 1, %s17
    %p23 = scmp.ge.s32.totalorder %s22, 1
    %s24 = scalar_select %p23, 0, %s22
    %s25 = sadd.s32 1, %s16
    %s26 = scalar_select %p23, %s25, %s16
    %p27 = scmp.ge.s32.totalorder %s26, 2
    %s28 = scalar_select %p27, 0, %s26
    %s29 = ssub.s32 %s16, %s28
    %s30 = ssub.s32 %s17, %s24
    %s31 = sor.u32 %s29, %s30
    %p32 = scmp.eq.s32.totalorder %s31, 0
    %s34 = sadd.s32 %s33, 1
    %s35 = scalar_select %p32, %s33, %s34
    %p38 = pneg %p32
    %p39 = scmp.eq.s32.totalorder %s9, 1
    %p40 = por %p38, %p39
    %p41 = scmp.ne.s32.totalorder %s33, %s36
    %p42 = scmp.eq.s32.totalorder %s9, 0
    %p43 = por %p41, %p42
    %p44 = scmp.ne.s32.totalorder %s33, %s36
    %p45 = scmp.eq.s32.totalorder %s14, 1
    %p46 = por %p44, %p45
    %p47 = scmp.ne.s32.totalorder %s36, %s37
    %p48 = scmp.eq.s32.totalorder %s14, 0
    %p49 = por %p47, %p48
    %p50 = scmp.ne.s32.totalorder %s36, %s37
    %p51 = scmp.eq.s32.totalorder %s15, 1
    %p52 = por %p50, %p51
    %p54 = scmp.ne.s32.totalorder %s37, %s53
    %p55 = scmp.eq.s32.totalorder %s15, 0
    %p56 = por %p54, %p55
    %s57 = ssub.s32 %s16, %s28
    %s58 = ssub.s32 %s17, %s24
    %s59 = sor.u32 %s57, %s58
    %p60 = scmp.eq.s32.totalorder %s59, 0
    %s62 = sadd.s32 %s61, 1
    %s63 = scalar_select %p60, %s61, %s62
    %p66 = pneg %p60
    %p67 = scmp.eq.s32.totalorder %s9, 1
    %p68 = por %p66, %p67
    %p69 = scmp.ne.s32.totalorder %s61, %s64
    %p70 = scmp.eq.s32.totalorder %s9, 0
    %p71 = por %p69, %p70
    %p72 = scmp.ne.s32.totalorder %s61, %s64
    %p73 = scmp.eq.s32.totalorder %s14, 1
    %p74 = por %p72, %p73
    %p75 = scmp.ne.s32.totalorder %s64, %s65
    %p76 = scmp.eq.s32.totalorder %s14, 0
    %p77 = por %p75, %p76
    %p78 = scmp.ne.s32.totalorder %s64, %s65
    %p79 = scmp.eq.s32.totalorder %s15, 1
    %p80 = por %p78, %p79
    %p82 = scmp.ne.s32.totalorder %s65, %s81
    %p83 = scmp.eq.s32.totalorder %s15, 0
    %p84 = por %p82, %p83
    %s86 = sadd.s32 %s85, 1
    %p89 = scmp.eq.s32.totalorder %s9, 1
    %p90 = scmp.ne.s32.totalorder %s85, %s87
    %p91 = scmp.eq.s32.totalorder %s9, 0
    %p92 = por %p90, %p91
    %p93 = scmp.ne.s32.totalorder %s85, %s87
    %p94 = scmp.eq.s32.totalorder %s14, 1
    %p95 = por %p93, %p94
    %p96 = scmp.ne.s32.totalorder %s87, %s88
    %p97 = scmp.eq.s32.totalorder %s14, 0
    %p98 = por %p96, %p97
    %p99 = scmp.ne.s32.totalorder %s87, %s88
    %p100 = scmp.eq.s32.totalorder %s15, 1
    %p101 = por %p99, %p100
    %p103 = scmp.ne.s32.totalorder %s88, %s102
    %p104 = scmp.eq.s32.totalorder %s15, 0
    %p105 = por %p103, %p104
    %s106 = ssub.s32 %s16, %s28
    %s107 = ssub.s32 %s17, %s24
    %s108 = sor.u32 %s106, %s107
    %p109 = scmp.eq.s32.totalorder %s108, 0
    %s111 = sadd.s32 %s110, 1
    %s112 = scalar_select %p109, %s110, %s111
    %p115 = pneg %p109
    %p116 = scmp.eq.s32.totalorder %s9, 1
    %p117 = por %p115, %p116
    %p118 = scmp.ne.s32.totalorder %s110, %s113
    %p119 = scmp.eq.s32.totalorder %s9, 0
    %p120 = por %p118, %p119
    %p121 = scmp.ne.s32.totalorder %s110, %s113
    %p122 = scmp.eq.s32.totalorder %s14, 1
    %p123 = por %p121, %p122
    %p124 = scmp.ne.s32.totalorder %s113, %s114
    %p125 = scmp.eq.s32.totalorder %s14, 0
    %p126 = por %p124, %p125
    %p127 = scmp.ne.s32.totalorder %s113, %s114
    %p128 = scmp.eq.s32.totalorder %s15, 1
    %p129 = por %p127, %p128
    %p131 = scmp.ne.s32.totalorder %s114, %s130
    %p132 = scmp.eq.s32.totalorder %s15, 0
    %p133 = por %p131, %p132
    %p134 = scmp.le.s32.totalorder 1, %s9
    %p135 = scmp.lt.s32.totalorder %s9, 3
    %p136 = pnand %p134, %p135
    %p137 = pneg %p136
    // Predicated region
    $region9: #{separable_conv2d.1} parent=5 // pred_check
      _
    $region10: #{separable_conv2d.1} parent=5 // pred_check_branch
      %139 = sbr.rel (%p136) target = $region12
    $region11: #{separable_conv2d.1} parent=5 // pred_region
      %s140 = ssub.s32 %s9, 1
      // Predicated region
      $region13: #{separable_conv2d.1} parent=11 // pred_check
        %p141 = pneg %p98
      $region14: #{separable_conv2d.1} parent=11 // pred_check_branch
        %143 = sbr.rel (%p141) target = $region16
      $region15: #{separable_conv2d.1} parent=11 // pred_region
        _
      $region16: #{separable_conv2d.1} parent=11 // pred_fallthru
        _
    $region12: #{separable_conv2d.1} parent=5 // pred_fallthru
      _
    %p144 = scmp.lt.s32.totalorder %s9, 2
    // Predicated region
    $region17: #{separable_conv2d.1} parent=5 // pred_check
      %p145 = pneg %p144
    $region18: #{separable_conv2d.1} parent=5 // pred_check_branch
      %147 = sbr.rel (%p145) target = $region20
    $region19: #{separable_conv2d.1} parent=5 // pred_region
      // Predicated region
      $region21: #{separable_conv2d.1} parent=19 // pred_check
        %p148 = pneg %p43
      $region22: #{separable_conv2d.1} parent=19 // pred_check_branch
        %150 = sbr.rel (%p148) target = $region24
      $region23: #{separable_conv2d.1} parent=19 // pred_region
        %s151 = smul.u32 3, %s17
        %p152 = scmp.lt.s32.totalorder %s16, 1
        %s153 = scalar_select %p152, %s16, 1
        %p154 = scmp.lt.s32.totalorder %s151, 2
        %s155 = scalar_select %p154, %s151, 2
        %s156 = smul.addr %s153, 3
        %s157 = sadd.s32 %s155, %s156
        %s158 = smul.addr %s157, 4
        %s159 = scalar_lea.vmem %s0, %s158
        %s160 = smul.u32 3, %s17
      $region24: #{separable_conv2d.1} parent=19 // pred_fallthru
        _
      // Predicated region
      $region25: #{separable_conv2d.1} parent=19 // pred_check
        %p161 = pneg %p71
      $region26: #{separable_conv2d.1} parent=19 // pred_check_branch
        %163 = sbr.rel (%p161) target = $region28
      $region27: #{separable_conv2d.1} parent=19 // pred_region
        %p164 = scmp.lt.s32.totalorder %s16, 1
        %s165 = scalar_select %p164, %s16, 1
        %p166 = scmp.lt.s32.totalorder %s17, 0
        %s167 = scalar_select %p166, %s17, 0
        %s168 = sadd.s32 %s167, %s165
        %s169 = smul.addr %s168, 4
        %s170 = scalar_lea.vmem %s1, %s169
      $region28: #{separable_conv2d.1} parent=19 // pred_fallthru
        _
    $region20: #{separable_conv2d.1} parent=5 // pred_fallthru
      _
    %p171 = scmp.le.s32.totalorder 1, %s9
    %p172 = scmp.lt.s32.totalorder %s9, 3
    %p173 = pnand %p171, %p172
    %p174 = pneg %p173
    // Predicated region
    $region29: #{separable_conv2d.1} parent=5 // pred_check
      _
    $region30: #{separable_conv2d.1} parent=5 // pred_check_branch
      %176 = sbr.rel (%p173) target = $region32
    $region31: #{separable_conv2d.1} parent=5 // pred_region
      %s177 = ssub.s32 %s9, 1
      %s178 = smul.u32 3, %s19
      %p179 = scmp.lt.s32.totalorder %s18, 1
      %s180 = scalar_select %p179, %s18, 1
      %p181 = scmp.lt.s32.totalorder %s178, 2
      %s182 = scalar_select %p181, %s178, 2
      %s183 = smul.addr %s180, 3
      %s184 = sadd.s32 %s182, %s183
      %s185 = smul.addr %s184, 4
      %s186 = scalar_lea.vmem %s0, %s185
      %p187 = pneg %p49
      %p188 = pneg %p46
      %p189 = scmp.lt.s32.totalorder %s18, 1
      %s190 = scalar_select %p189, %s18, 1
      %p191 = scmp.lt.s32.totalorder %s19, 0
      %s192 = scalar_select %p191, %s19, 0
      %s193 = sadd.s32 %s192, %s190
      %s194 = smul.addr %s193, 4
      %s195 = scalar_lea.vmem %s1, %s194
      %p196 = pneg %p77
      %p197 = pneg %p74
      %p198 = pneg %p98
      %p199 = pneg %p95
      %p200 = pneg %p126
      %p201 = pneg %p123
      %s202 = smul.u32 3, %s19
      %p203 = scmp.lt.s32.totalorder %s18, 1
      %s204 = scalar_select %p203, %s18, 1
      %p205 = scmp.lt.s32.totalorder %s202, 2
      %s206 = scalar_select %p205, %s202, 2
      %s207 = smul.addr %s204, 3
      %s208 = sadd.s32 %s206, %s207
      %s209 = smul.addr %s208, 8
      %s210 = scalar_lea.vmem %s3, %s209
      %s211 = smul.u32 3, %s19
      %p212 = scmp.lt.s32.totalorder %s18, 1
      %s213 = scalar_select %p212, %s18, 1
      %p214 = scmp.lt.s32.totalorder %s211, 2
      %s215 = scalar_select %p214, %s211, 2
      %s216 = smul.addr %s213, 3
      %s217 = sadd.s32 %s215, %s216
      %s218 = smul.addr %s217, 4
      %s219 = scalar_lea.vmem %s0, %s218
      %s220 = smul.u32 3, %s19
      %p221 = scmp.lt.s32.totalorder %s18, 1
      %s222 = scalar_select %p221, %s18, 1
      %p223 = scmp.lt.s32.totalorder %s19, 0
      %s224 = scalar_select %p223, %s19, 0
      %s225 = sadd.s32 %s224, %s222
      %s226 = smul.addr %s225, 4
      %s227 = scalar_lea.vmem %s1, %s226
      %s228 = smul.u32 3, %s19
      %p229 = scmp.lt.s32.totalorder %s18, 1
      %s230 = scalar_select %p229, %s18, 1
      %p231 = scmp.lt.s32.totalorder %s228, 2
      %s232 = scalar_select %p231, %s228, 2
      %s233 = smul.addr %s230, 3
      %s234 = sadd.s32 %s232, %s233
      %s235 = smul.addr %s234, 8
      %s236 = scalar_lea.vmem %s3, %s235
      %s237 = smul.u32 3, %s19
      %v238 = vld [vmem:[%s219] sm:$0xff]
      %v239 = vld [vmem:[%s219 + $0x8] sm:$0xf]
      %240 = vst [vmem:[#allocation2] sm:$0xff] %v238
      %vm241 = vcmask 257024
      %242 = vst.msk [vmem:[#allocation2 + $0x8] sm:$0xf] %vm241, %v239
      %v243 = vld [vmem:[%s227] sm:$0xf]
      %245 = vrot.lane.b32.xlu0 %v243, 32
      %v246 = vpop.permute.xlu0 %245
      %vm248 = vcmask 699648
      %249 = vst.msk [vmem:[#allocation2 + $0x8] sm:$0xf] %vm248, %v246
      %v250 = vld [vmem:[%s2] sm:$0xff]
      %v251 = vld [vmem:[%s2 + $0x8] sm:$0xff]
      %v252 = vld [vmem:[%s2 + $0x10] sm:$0xff]
      %v253 = vld [vmem:[%s2 + $0x18] sm:$0xff]
      %v254 = vld [vmem:[%s2 + $0x20] sm:$0xff]
      %v255 = vld [vmem:[%s2 + $0x28] sm:$0xff]
      %v256 = vld [vmem:[%s2 + $0x30] sm:$0xff]
      %v257 = vld [vmem:[%s2 + $0x38] sm:$0xff]
      %v258 = vld [vmem:[%s2 + $0x40] sm:$0xff]
      %v259 = vld [vmem:[#allocation2] sm:$0xff]
      %v260 = vld [vmem:[#allocation2 + $0x8] sm:$0xf]
      %v263 = vcombine.high %v259, %v259
      %264 = vrot.lane.b32.xlu0 %v259, 127
      %v265 = vpop.permute.xlu0 %264
      %266 = vrot.lane.b32.xlu0 %v263, 127
      %v267 = vpop.permute.xlu0 %266
      %268 = vrot.lane.b32.xlu0 %v260, 127
      %v269 = vpop.permute.xlu0 %268
      %vm270 = vcmask 1039360
      %v271 = vsel %vm270, %v265, %v267
      %v272 = vsel %vm270, %v267, %v269
      %vm273 = vcmask 31744
      %v275 = vsel %vm273, %v251, 0
      %vm277 = vcmask 1043456
      %v278 = vsel %vm277, %v271, 0
      %v280 = vsel %vm277, %v272, 0
      %v282 = vsel %vm277, %v269, 0
      %284 = vmatprep.subr.mxu0 %v280
      %285 = vmatpush1.msra.mxu0 %v278
      %286 = vmatprep.subr.mxu0 0.0
      %287 = vmatpush1.msra.mxu0 0.0
      %288 = vmatprep.subr.mxu0 0.0
      %289 = vmatpush1.msra.mxu0 0.0
      %290 = vmatprep.subr.mxu0 0.0
      %291 = vmatpush1.msra.mxu0 0.0
      %292 = vmatprep.subr.mxu0 0.0
      %293 = vmatpush1.msra.mxu0 0.0
      %294 = vmatprep.subr.mxu0 0.0
      %295 = vmatpush1.msra.mxu0 0.0
      %296 = vmatprep.subr.mxu0 0.0
      %297 = vmatpush1.msra.mxu0 0.0
      %298 = vmatprep.subr.mxu0 0.0
      %299 = vmatpush1.msra.mxu0 0.0
      %300 = vmatprep.subr.mxu0 0.0
      %301 = vmatpush1.msra.mxu0 0.0
      %302 = vmatprep.subr.mxu0 0.0
      %303 = vmatpush1.msra.mxu0 0.0
      %304 = vmatprep.subr.mxu0 0.0
      %305 = vmatpush1.msra.mxu0 0.0
      %306 = vmatprep.subr.mxu0 0.0
      %307 = vmatpush1.msra.mxu0 0.0
      %308 = vmatprep.subr.mxu0 0.0
      %309 = vmatpush1.msra.mxu0 0.0
      %310 = vmatprep.subr.mxu0 0.0
      %311 = vmatpush1.msra.mxu0 0.0
      %312 = vmatprep.subr.mxu0 0.0
      %313 = vmatpush1.msra.mxu0 0.0
      %314 = vmatprep.subr.mxu0 0.0
      %315 = vmatpush1.msra.mxu0 0.0
      %316 = vmatprep.subr.mxu0 0.0
      %317 = vmatpush1.msra.mxu0 0.0
      %318 = vmatprep.subr.mxu0 0.0
      %319 = vmatpush1.msra.mxu0 0.0
      %320 = vmatprep.subr.mxu0 0.0
      %321 = vmatpush1.msra.mxu0 0.0
      %322 = vmatprep.subr.mxu0 0.0
      %323 = vmatpush1.msra.mxu0 0.0
      %324 = vmatprep.subr.mxu0 0.0
      %325 = vmatpush1.msra.mxu0 0.0
      %326 = vmatprep.subr.mxu0 0.0
      %327 = vmatpush1.msra.mxu0 0.0
      %328 = vmatprep.subr.mxu0 0.0
      %329 = vmatpush1.msra.mxu0 0.0
      %330 = vmatprep.subr.mxu0 0.0
      %331 = vmatpush1.msra.mxu0 0.0
      %332 = vmatprep.subr.mxu0 0.0
      %333 = vmatpush1.msra.mxu0 0.0
      %334 = vmatprep.subr.mxu0 0.0
      %335 = vmatpush1.msra.mxu0 0.0
      %336 = vmatprep.subr.mxu0 0.0
      %337 = vmatpush1.msra.mxu0 0.0
      %338 = vmatprep.subr.mxu0 0.0
      %339 = vmatpush1.msra.mxu0 0.0
      %340 = vmatprep.subr.mxu0 0.0
      %341 = vmatpush1.msra.mxu0 0.0
      %342 = vmatprep.subr.mxu0 0.0
      %343 = vmatpush1.msra.mxu0 0.0
      %344 = vmatprep.subr.mxu0 0.0
      %345 = vmatpush1.msra.mxu0 0.0
      %346 = vmatprep.subr.mxu0 0.0
      %347 = vmatpush1.msra.mxu0 0.0
      %348 = vmatprep.mubr.f32.mxu0 0.0
      %349 = vmatmul.mubr.f32.gmra.mrb[0].mxu0 %v275
      %v350 = vpop.f32.mrb[0].mxu0
      %v351 = vadd.f32 0.0, %v350
      %v352 = vpop.f32.mrb[0].mxu0
      %v353 = vadd.f32 0.0, %v352
      %354 = vdwg.mxu0
      %355 = vmatprep.subr.mxu0 0.0
      %356 = vmatpush1.msra.mxu0 %v282
      %357 = vmatprep.subr.mxu0 0.0
      %358 = vmatpush1.msra.mxu0 0.0
      %359 = vmatprep.subr.mxu0 0.0
      %360 = vmatpush1.msra.mxu0 0.0
      %361 = vmatprep.subr.mxu0 0.0
      %362 = vmatpush1.msra.mxu0 0.0
      %363 = vmatprep.subr.mxu0 0.0
      %364 = vmatpush1.msra.mxu0 0.0
      %365 = vmatprep.subr.mxu0 0.0
      %366 = vmatpush1.msra.mxu0 0.0
      %367 = vmatprep.subr.mxu0 0.0
      %368 = vmatpush1.msra.mxu0 0.0
      %369 = vmatprep.subr.mxu0 0.0
      %370 = vmatpush1.msra.mxu0 0.0
      %371 = vmatprep.subr.mxu0 0.0
      %372 = vmatpush1.msra.mxu0 0.0
      %373 = vmatprep.subr.mxu0 0.0
      %374 = vmatpush1.msra.mxu0 0.0
      %375 = vmatprep.subr.mxu0 0.0
      %376 = vmatpush1.msra.mxu0 0.0
      %377 = vmatprep.subr.mxu0 0.0
      %378 = vmatpush1.msra.mxu0 0.0
      %379 = vmatprep.subr.mxu0 0.0
      %380 = vmatpush1.msra.mxu0 0.0
      %381 = vmatprep.subr.mxu0 0.0
      %382 = vmatpush1.msra.mxu0 0.0
      %383 = vmatprep.subr.mxu0 0.0
      %384 = vmatpush1.msra.mxu0 0.0
      %385 = vmatprep.subr.mxu0 0.0
      %386 = vmatpush1.msra.mxu0 0.0
      %387 = vmatprep.subr.mxu0 0.0
      %388 = vmatpush1.msra.mxu0 0.0
      %389 = vmatprep.subr.mxu0 0.0
      %390 = vmatpush1.msra.mxu0 0.0
      %391 = vmatprep.subr.mxu0 0.0
      %392 = vmatpush1.msra.mxu0 0.0
      %393 = vmatprep.subr.mxu0 0.0
      %394 = vmatpush1.msra.mxu0 0.0
      %395 = vmatprep.subr.mxu0 0.0
      %396 = vmatpush1.msra.mxu0 0.0
      %397 = vmatprep.subr.mxu0 0.0
      %398 = vmatpush1.msra.mxu0 0.0
      %399 = vmatprep.subr.mxu0 0.0
      %400 = vmatpush1.msra.mxu0 0.0
      %401 = vmatprep.subr.mxu0 0.0
      %402 = vmatpush1.msra.mxu0 0.0
      %403 = vmatprep.subr.mxu0 0.0
      %404 = vmatpush1.msra.mxu0 0.0
      %405 = vmatprep.subr.mxu0 0.0
      %406 = vmatpush1.msra.mxu0 0.0
      %407 = vmatprep.subr.mxu0 0.0
      %408 = vmatpush1.msra.mxu0 0.0
      %409 = vmatprep.subr.mxu0 0.0
      %410 = vmatpush1.msra.mxu0 0.0
      %411 = vmatprep.subr.mxu0 0.0
      %412 = vmatpush1.msra.mxu0 0.0
      %413 = vmatprep.subr.mxu0 0.0
      %414 = vmatpush1.msra.mxu0 0.0
      %415 = vmatprep.subr.mxu0 0.0
      %416 = vmatpush1.msra.mxu0 0.0
      %417 = vmatprep.subr.mxu0 0.0
      %418 = vmatpush1.msra.mxu0 0.0
      %419 = vmatprep.mubr.f32.mxu0 0.0
      %420 = vmatmul.mubr.f32.gmra.mrb[0].mxu0 %v275
      %v421 = vpop.f32.mrb[0].mxu0
      %v422 = vadd.f32 0.0, %v421
      %v423 = vpop.f32.mrb[0].mxu0
      %424 = vdwg.mxu0
      %v426 = vsel %vm273, %v250, 0
      %v428 = vsel %vm277, %v259, 0
      %v430 = vsel %vm277, %v263, 0
      %v432 = vsel %vm277, %v260, 0
      %434 = vmatprep.subr.mxu0 %v430
      %435 = vmatpush1.msra.mxu0 %v428
      %436 = vmatprep.subr.mxu0 0.0
      %437 = vmatpush1.msra.mxu0 0.0
      %438 = vmatprep.subr.mxu0 0.0
      %439 = vmatpush1.msra.mxu0 0.0
      %440 = vmatprep.subr.mxu0 0.0
      %441 = vmatpush1.msra.mxu0 0.0
      %442 = vmatprep.subr.mxu0 0.0
      %443 = vmatpush1.msra.mxu0 0.0
      %444 = vmatprep.subr.mxu0 0.0
      %445 = vmatpush1.msra.mxu0 0.0
      %446 = vmatprep.subr.mxu0 0.0
      %447 = vmatpush1.msra.mxu0 0.0
      %448 = vmatprep.subr.mxu0 0.0
      %449 = vmatpush1.msra.mxu0 0.0
      %450 = vmatprep.subr.mxu0 0.0
      %451 = vmatpush1.msra.mxu0 0.0
      %452 = vmatprep.subr.mxu0 0.0
      %453 = vmatpush1.msra.mxu0 0.0
      %454 = vmatprep.subr.mxu0 0.0
      %455 = vmatpush1.msra.mxu0 0.0
      %456 = vmatprep.subr.mxu0 0.0
      %457 = vmatpush1.msra.mxu0 0.0
      %458 = vmatprep.subr.mxu0 0.0
      %459 = vmatpush1.msra.mxu0 0.0
      %460 = vmatprep.subr.mxu0 0.0
      %461 = vmatpush1.msra.mxu0 0.0
      %462 = vmatprep.subr.mxu0 0.0
      %463 = vmatpush1.msra.mxu0 0.0
      %464 = vmatprep.subr.mxu0 0.0
      %465 = vmatpush1.msra.mxu0 0.0
      %466 = vmatprep.subr.mxu0 0.0
      %467 = vmatpush1.msra.mxu0 0.0
      %468 = vmatprep.subr.mxu0 0.0
      %469 = vmatpush1.msra.mxu0 0.0
      %470 = vmatprep.subr.mxu0 0.0
      %471 = vmatpush1.msra.mxu0 0.0
      %472 = vmatprep.subr.mxu0 0.0
      %473 = vmatpush1.msra.mxu0 0.0
      %474 = vmatprep.subr.mxu0 0.0
      %475 = vmatpush1.msra.mxu0 0.0
      %476 = vmatprep.subr.mxu0 0.0
      %477 = vmatpush1.msra.mxu0 0.0
      %478 = vmatprep.subr.mxu0 0.0
      %479 = vmatpush1.msra.mxu0 0.0
      %480 = vmatprep.subr.mxu0 0.0
      %481 = vmatpush1.msra.mxu0 0.0
      %482 = vmatprep.subr.mxu0 0.0
      %483 = vmatpush1.msra.mxu0 0.0
      %484 = vmatprep.subr.mxu0 0.0
      %485 = vmatpush1.msra.mxu0 0.0
      %486 = vmatprep.subr.mxu0 0.0
      %487 = vmatpush1.msra.mxu0 0.0
      %488 = vmatprep.subr.mxu0 0.0
      %489 = vmatpush1.msra.mxu0 0.0
      %490 = vmatprep.subr.mxu0 0.0
      %491 = vmatpush1.msra.mxu0 0.0
      %492 = vmatprep.subr.mxu0 0.0
      %493 = vmatpush1.msra.mxu0 0.0
      %494 = vmatprep.subr.mxu0 0.0
      %495 = vmatpush1.msra.mxu0 0.0
      %496 = vmatprep.subr.mxu0 0.0
      %497 = vmatpush1.msra.mxu0 0.0
      %498 = vmatprep.mubr.f32.mxu0 0.0
      %499 = vmatmul.mubr.f32.gmra.mrb[0].mxu0 %v426
      %v500 = vpop.f32.mrb[0].mxu0
      %v501 = vadd.f32 %v351, %v500
      %v502 = vpop.f32.mrb[0].mxu0
      %v503 = vadd.f32 %v353, %v502
      %504 = vdwg.mxu0
      %505 = vmatprep.subr.mxu0 0.0
      %506 = vmatpush1.msra.mxu0 %v432
      %507 = vmatprep.subr.mxu0 0.0
      %508 = vmatpush1.msra.mxu0 0.0
      %509 = vmatprep.subr.mxu0 0.0
      %510 = vmatpush1.msra.mxu0 0.0
      %511 = vmatprep.subr.mxu0 0.0
      %512 = vmatpush1.msra.mxu0 0.0
      %513 = vmatprep.subr.mxu0 0.0
      %514 = vmatpush1.msra.mxu0 0.0
      %515 = vmatprep.subr.mxu0 0.0
      %516 = vmatpush1.msra.mxu0 0.0
      %517 = vmatprep.subr.mxu0 0.0
      %518 = vmatpush1.msra.mxu0 0.0
      %519 = vmatprep.subr.mxu0 0.0
      %520 = vmatpush1.msra.mxu0 0.0
      %521 = vmatprep.subr.mxu0 0.0
      %522 = vmatpush1.msra.mxu0 0.0
      %523 = vmatprep.subr.mxu0 0.0
      %524 = vmatpush1.msra.mxu0 0.0
      %525 = vmatprep.subr.mxu0 0.0
      %526 = vmatpush1.msra.mxu0 0.0
      %527 = vmatprep.subr.mxu0 0.0
      %528 = vmatpush1.msra.mxu0 0.0
      %529 = vmatprep.subr.mxu0 0.0
      %530 = vmatpush1.msra.mxu0 0.0
      %531 = vmatprep.subr.mxu0 0.0
      %532 = vmatpush1.msra.mxu0 0.0
      %533 = vmatprep.subr.mxu0 0.0
      %534 = vmatpush1.msra.mxu0 0.0
      %535 = vmatprep.subr.mxu0 0.0
      %536 = vmatpush1.msra.mxu0 0.0
      %537 = vmatprep.subr.mxu0 0.0
      %538 = vmatpush1.msra.mxu0 0.0
      %539 = vmatprep.subr.mxu0 0.0
      %540 = vmatpush1.msra.mxu0 0.0
      %541 = vmatprep.subr.mxu0 0.0
      %542 = vmatpush1.msra.mxu0 0.0
      %543 = vmatprep.subr.mxu0 0.0
      %544 = vmatpush1.msra.mxu0 0.0
      %545 = vmatprep.subr.mxu0 0.0
      %546 = vmatpush1.msra.mxu0 0.0
      %547 = vmatprep.subr.mxu0 0.0
      %548 = vmatpush1.msra.mxu0 0.0
      %549 = vmatprep.subr.mxu0 0.0
      %550 = vmatpush1.msra.mxu0 0.0
      %551 = vmatprep.subr.mxu0 0.0
      %552 = vmatpush1.msra.mxu0 0.0
      %553 = vmatprep.subr.mxu0 0.0
      %554 = vmatpush1.msra.mxu0 0.0
      %555 = vmatprep.subr.mxu0 0.0
      %556 = vmatpush1.msra.mxu0 0.0
      %557 = vmatprep.subr.mxu0 0.0
      %558 = vmatpush1.msra.mxu0 0.0
      %559 = vmatprep.subr.mxu0 0.0
      %560 = vmatpush1.msra.mxu0 0.0
      %561 = vmatprep.subr.mxu0 0.0
      %562 = vmatpush1.msra.mxu0 0.0
      %563 = vmatprep.subr.mxu0 0.0
      %564 = vmatpush1.msra.mxu0 0.0
      %565 = vmatprep.subr.mxu0 0.0
      %566 = vmatpush1.msra.mxu0 0.0
      %567 = vmatprep.subr.mxu0 0.0
      %568 = vmatpush1.msra.mxu0 0.0
      %569 = vmatprep.mubr.f32.mxu0 0.0
      %570 = vmatmul.mubr.f32.gmra.mrb[0].mxu0 %v426
      %v571 = vpop.f32.mrb[0].mxu0
      %v572 = vadd.f32 %v422, %v571
      %v573 = vpop.f32.mrb[0].mxu0
      %574 = vdwg.mxu0
      %v575 = vld [vmem:[#allocation2] sm:$0xff]
      %v576 = vld [vmem:[#allocation2 + $0x8] sm:$0xf]
      %v579 = vcombine.high %v575, %v575
      %580 = vrot.lane.b32.xlu0 %v575, 126
      %v581 = vpop.permute.xlu0 %580
      %582 = vrot.lane.b32.xlu0 %v579, 126
      %v583 = vpop.permute.xlu0 %582
      %584 = vrot.lane.b32.xlu0 %v576, 126
      %v585 = vpop.permute.xlu0 %584
      %vm586 = vcmask 1031168
      %v587 = vsel %vm586, %v581, %v583
      %v588 = vsel %vm586, %v583, %v585
      %v590 = vsel %vm273, %v252, 0
      %v592 = vsel %vm277, %v587, 0
      %v594 = vsel %vm277, %v588, 0
      %v596 = vsel %vm277, %v585, 0
      %598 = vmatprep.subr.mxu0 %v594
      %599 = vmatpush1.msra.mxu0 %v592
      %600 = vmatprep.subr.mxu0 0.0
      %601 = vmatpush1.msra.mxu0 0.0
      %602 = vmatprep.subr.mxu0 0.0
      %603 = vmatpush1.msra.mxu0 0.0
      %604 = vmatprep.subr.mxu0 0.0
      %605 = vmatpush1.msra.mxu0 0.0
      %606 = vmatprep.subr.mxu0 0.0
      %607 = vmatpush1.msra.mxu0 0.0
      %608 = vmatprep.subr.mxu0 0.0
      %609 = vmatpush1.msra.mxu0 0.0
      %610 = vmatprep.subr.mxu0 0.0
      %611 = vmatpush1.msra.mxu0 0.0
      %612 = vmatprep.subr.mxu0 0.0
      %613 = vmatpush1.msra.mxu0 0.0
      %614 = vmatprep.subr.mxu0 0.0
      %615 = vmatpush1.msra.mxu0 0.0
      %616 = vmatprep.subr.mxu0 0.0
      %617 = vmatpush1.msra.mxu0 0.0
      %618 = vmatprep.subr.mxu0 0.0
      %619 = vmatpush1.msra.mxu0 0.0
      %620 = vmatprep.subr.mxu0 0.0
      %621 = vmatpush1.msra.mxu0 0.0
      %622 = vmatprep.subr.mxu0 0.0
      %623 = vmatpush1.msra.mxu0 0.0
      %624 = vmatprep.subr.mxu0 0.0
      %625 = vmatpush1.msra.mxu0 0.0
      %626 = vmatprep.subr.mxu0 0.0
      %627 = vmatpush1.msra.mxu0 0.0
      %628 = vmatprep.subr.mxu0 0.0
      %629 = vmatpush1.msra.mxu0 0.0
      %630 = vmatprep.subr.mxu0 0.0
      %631 = vmatpush1.msra.mxu0 0.0
      %632 = vmatprep.subr.mxu0 0.0
      %633 = vmatpush1.msra.mxu0 0.0
      %634 = vmatprep.subr.mxu0 0.0
      %635 = vmatpush1.msra.mxu0 0.0
      %636 = vmatprep.subr.mxu0 0.0
      %637 = vmatpush1.msra.mxu0 0.0
      %638 = vmatprep.subr.mxu0 0.0
      %639 = vmatpush1.msra.mxu0 0.0
      %640 = vmatprep.subr.mxu0 0.0
      %641 = vmatpush1.msra.mxu0 0.0
      %642 = vmatprep.subr.mxu0 0.0
      %643 = vmatpush1.msra.mxu0 0.0
      %644 = vmatprep.subr.mxu0 0.0
      %645 = vmatpush1.msra.mxu0 0.0
      %646 = vmatprep.subr.mxu0 0.0
      %647 = vmatpush1.msra.mxu0 0.0
      %648 = vmatprep.subr.mxu0 0.0
      %649 = vmatpush1.msra.mxu0 0.0
      %650 = vmatprep.subr.mxu0 0.0
      %651 = vmatpush1.msra.mxu0 0.0
      %652 = vmatprep.subr.mxu0 0.0
      %653 = vmatpush1.msra.mxu0 0.0
      %654 = vmatprep.subr.mxu0 0.0
      %655 = vmatpush1.msra.mxu0 0.0
      %656 = vmatprep.subr.mxu0 0.0
      %657 = vmatpush1.msra.mxu0 0.0
      %658 = vmatprep.subr.mxu0 0.0
      %659 = vmatpush1.msra.mxu0 0.0
      %660 = vmatprep.subr.mxu0 0.0
      %661 = vmatpush1.msra.mxu0 0.0
      %662 = vmatprep.mubr.f32.mxu0 0.0
      %663 = vmatmul.mubr.f32.gmra.mrb[0].mxu0 %v590
      %v664 = vpop.f32.mrb[0].mxu0
      %v665 = vadd.f32 0.0, %v664
      %v666 = vpop.f32.mrb[0].mxu0
      %v667 = vadd.f32 0.0, %v666
      %668 = vdwg.mxu0
      %669 = vmatprep.subr.mxu0 0.0
      %670 = vmatpush1.msra.mxu0 %v596
      %671 = vmatprep.subr.mxu0 0.0
      %672 = vmatpush1.msra.mxu0 0.0
      %673 = vmatprep.subr.mxu0 0.0
      %674 = vmatpush1.msra.mxu0 0.0
      %675 = vmatprep.subr.mxu0 0.0
      %676 = vmatpush1.msra.mxu0 0.0
      %677 = vmatprep.subr.mxu0 0.0
      %678 = vmatpush1.msra.mxu0 0.0
      %679 = vmatprep.subr.mxu0 0.0
      %680 = vmatpush1.msra.mxu0 0.0
      %681 = vmatprep.subr.mxu0 0.0
      %682 = vmatpush1.msra.mxu0 0.0
      %683 = vmatprep.subr.mxu0 0.0
      %684 = vmatpush1.msra.mxu0 0.0
      %685 = vmatprep.subr.mxu0 0.0
      %686 = vmatpush1.msra.mxu0 0.0
      %687 = vmatprep.subr.mxu0 0.0
      %688 = vmatpush1.msra.mxu0 0.0
      %689 = vmatprep.subr.mxu0 0.0
      %690 = vmatpush1.msra.mxu0 0.0
      %691 = vmatprep.subr.mxu0 0.0
      %692 = vmatpush1.msra.mxu0 0.0
      %693 = vmatprep.subr.mxu0 0.0
      %694 = vmatpush1.msra.mxu0 0.0
      %695 = vmatprep.subr.mxu0 0.0
      %696 = vmatpush1.msra.mxu0 0.0
      %697 = vmatprep.subr.mxu0 0.0
      %698 = vmatpush1.msra.mxu0 0.0
      %699 = vmatprep.subr.mxu0 0.0
      %700 = vmatpush1.msra.mxu0 0.0
      %701 = vmatprep.subr.mxu0 0.0
      %702 = vmatpush1.msra.mxu0 0.0
      %703 = vmatprep.subr.mxu0 0.0
      %704 = vmatpush1.msra.mxu0 0.0
      %705 = vmatprep.subr.mxu0 0.0
      %706 = vmatpush1.msra.mxu0 0.0
      %707 = vmatprep.subr.mxu0 0.0
      %708 = vmatpush1.msra.mxu0 0.0
      %709 = vmatprep.subr.mxu0 0.0
      %710 = vmatpush1.msra.mxu0 0.0
      %711 = vmatprep.subr.mxu0 0.0
      %712 = vmatpush1.msra.mxu0 0.0
      %713 = vmatprep.subr.mxu0 0.0
      %714 = vmatpush1.msra.mxu0 0.0
      %715 = vmatprep.subr.mxu0 0.0
      %716 = vmatpush1.msra.mxu0 0.0
      %717 = vmatprep.subr.mxu0 0.0
      %718 = vmatpush1.msra.mxu0 0.0
      %719 = vmatprep.subr.mxu0 0.0
      %720 = vmatpush1.msra.mxu0 0.0
      %721 = vmatprep.subr.mxu0 0.0
      %722 = vmatpush1.msra.mxu0 0.0
      %723 = vmatprep.subr.mxu0 0.0
      %724 = vmatpush1.msra.mxu0 0.0
      %725 = vmatprep.subr.mxu0 0.0
      %726 = vmatpush1.msra.mxu0 0.0
      %727 = vmatprep.subr.mxu0 0.0
      %728 = vmatpush1.msra.mxu0 0.0
      %729 = vmatprep.subr.mxu0 0.0
      %730 = vmatpush1.msra.mxu0 0.0
      %731 = vmatprep.subr.mxu0 0.0
      %732 = vmatpush1.msra.mxu0 0.0
      %733 = vmatprep.mubr.f32.mxu0 0.0
      %734 = vmatmul.mubr.f32.gmra.mrb[0].mxu0 %v590
      %v735 = vpop.f32.mrb[0].mxu0
      %v736 = vadd.f32 0.0, %v735
      %v737 = vpop.f32.mrb[0].mxu0
      %738 = vdwg.mxu0
      %v739 = vadd.f32 %v501, %v665
      %v740 = vadd.f32 %v503, %v667
      %v741 = vadd.f32 %v572, %v736
      %v742 = vld [vmem:[#allocation2] sm:$0xff]
      %v743 = vld [vmem:[#allocation2 + $0x8] sm:$0xf]
      %v746 = vcombine.high %v742, %v742
      %747 = vrot.lane.b32.xlu0 %v742, 110
      %v748 = vpop.permute.xlu0 %747
      %749 = vrot.lane.b32.xlu0 %v746, 110
      %v750 = vpop.permute.xlu0 %749
      %751 = vrot.lane.b32.xlu0 %v743, 110
      %v752 = vpop.permute.xlu0 %751
      %vm753 = vcmask 900096
      %v754 = vsel %vm753, %v748, %v750
      %v755 = vsel %vm753, %v750, %v752
      %v757 = vsel %vm273, %v253, 0
      %v759 = vsel %vm277, %v754, 0
      %v761 = vsel %vm277, %v755, 0
      %v763 = vsel %vm277, %v752, 0
      %765 = vmatprep.subr.mxu0 %v761
      %766 = vmatpush1.msra.mxu0 %v759
      %767 = vmatprep.subr.mxu0 0.0
      %768 = vmatpush1.msra.mxu0 0.0
      %769 = vmatprep.subr.mxu0 0.0
      %770 = vmatpush1.msra.mxu0 0.0
      %771 = vmatprep.subr.mxu0 0.0
      %772 = vmatpush1.msra.mxu0 0.0
      %773 = vmatprep.subr.mxu0 0.0
      %774 = vmatpush1.msra.mxu0 0.0
      %775 = vmatprep.subr.mxu0 0.0
      %776 = vmatpush1.msra.mxu0 0.0
      %777 = vmatprep.subr.mxu0 0.0
      %778 = vmatpush1.msra.mxu0 0.0
      %779 = vmatprep.subr.mxu0 0.0
      %780 = vmatpush1.msra.mxu0 0.0
      %781 = vmatprep.subr.mxu0 0.0
      %782 = vmatpush1.msra.mxu0 0.0
      %783 = vmatprep.subr.mxu0 0.0
      %784 = vmatpush1.msra.mxu0 0.0
      %785 = vmatprep.subr.mxu0 0.0
      %786 = vmatpush1.msra.mxu0 0.0
      %787 = vmatprep.subr.mxu0 0.0
      %788 = vmatpush1.msra.mxu0 0.0
      %789 = vmatprep.subr.mxu0 0.0
      %790 = vmatpush1.msra.mxu0 0.0
      %791 = vmatprep.subr.mxu0 0.0
      %792 = vmatpush1.msra.mxu0 0.0
      %793 = vmatprep.subr.mxu0 0.0
      %794 = vmatpush1.msra.mxu0 0.0
      %795 = vmatprep.subr.mxu0 0.0
      %796 = vmatpush1.msra.mxu0 0.0
      %797 = vmatprep.subr.mxu0 0.0
      %798 = vmatpush1.msra.mxu0 0.0
      %799 = vmatprep.subr.mxu0 0.0
      %800 = vmatpush1.msra.mxu0 0.0
      %801 = vmatprep.subr.mxu0 0.0
      %802 = vmatpush1.msra.mxu0 0.0
      %803 = vmatprep.subr.mxu0 0.0
      %804 = vmatpush1.msra.mxu0 0.0
      %805 = vmatprep.subr.mxu0 0.0
      %806 = vmatpush1.msra.mxu0 0.0
      %807 = vmatprep.subr.mxu0 0.0
      %808 = vmatpush1.msra.mxu0 0.0
      %809 = vmatprep.subr.mxu0 0.0
      %810 = vmatpush1.msra.mxu0 0.0
      %811 = vmatprep.subr.mxu0 0.0
      %812 = vmatpush1.msra.mxu0 0.0
      %813 = vmatprep.subr.mxu0 0.0
      %814 = vmatpush1.msra.mxu0 0.0
      %815 = vmatprep.subr.mxu0 0.0
      %816 = vmatpush1.msra.mxu0 0.0
      %817 = vmatprep.subr.mxu0 0.0
      %818 = vmatpush1.msra.mxu0 0.0
      %819 = vmatprep.subr.mxu0 0.0
      %820 = vmatpush1.msra.mxu0 0.0
      %821 = vmatprep.subr.mxu0 0.0
      %822 = vmatpush1.msra.mxu0 0.0
      %823 = vmatprep.subr.mxu0 0.0
      %824 = vmatpush1.msra.mxu0 0.0
      %825 = vmatprep.subr.mxu0 0.0
      %826 = vmatpush1.msra.mxu0 0.0
      %827 = vmatprep.subr.mxu0 0.0
      %828 = vmatpush1.msra.mxu0 0.0
      %829 = vmatprep.mubr.f32.mxu0 0.0
      %830 = vmatmul.mubr.f32.gmra.mrb[0].mxu0 %v757
      %v831 = vpop.f32.mrb[0].mxu0
      %v832 = vadd.f32 0.0, %v831
      %v833 = vpop.f32.mrb[0].mxu0
      %v834 = vadd.f32 0.0, %v833
      %835 = vdwg.mxu0
      %836 = vmatprep.subr.mxu0 0.0
      %837 = vmatpush1.msra.mxu0 %v763
      %838 = vmatprep.subr.mxu0 0.0
      %839 = vmatpush1.msra.mxu0 0.0
      %840 = vmatprep.subr.mxu0 0.0
      %841 = vmatpush1.msra.mxu0 0.0
      %842 = vmatprep.subr.mxu0 0.0
      %843 = vmatpush1.msra.mxu0 0.0
      %844 = vmatprep.subr.mxu0 0.0
      %845 = vmatpush1.msra.mxu0 0.0
      %846 = vmatprep.subr.mxu0 0.0
      %847 = vmatpush1.msra.mxu0 0.0
      %848 = vmatprep.subr.mxu0 0.0
      %849 = vmatpush1.msra.mxu0 0.0
      %850 = vmatprep.subr.mxu0 0.0
      %851 = vmatpush1.msra.mxu0 0.0
      %852 = vmatprep.subr.mxu0 0.0
      %853 = vmatpush1.msra.mxu0 0.0
      %854 = vmatprep.subr.mxu0 0.0
      %855 = vmatpush1.msra.mxu0 0.0
      %856 = vmatprep.subr.mxu0 0.0
      %857 = vmatpush1.msra.mxu0 0.0
      %858 = vmatprep.subr.mxu0 0.0
      %859 = vmatpush1.msra.mxu0 0.0
      %860 = vmatprep.subr.mxu0 0.0
      %861 = vmatpush1.msra.mxu0 0.0
      %862 = vmatprep.subr.mxu0 0.0
      %863 = vmatpush1.msra.mxu0 0.0
      %864 = vmatprep.subr.mxu0 0.0
      %865 = vmatpush1.msra.mxu0 0.0
      %866 = vmatprep.subr.mxu0 0.0
      %867 = vmatpush1.msra.mxu0 0.0
      %868 = vmatprep.subr.mxu0 0.0
      %869 = vmatpush1.msra.mxu0 0.0
      %870 = vmatprep.subr.mxu0 0.0
      %871 = vmatpush1.msra.mxu0 0.0
      %872 = vmatprep.subr.mxu0 0.0
      %873 = vmatpush1.msra.mxu0 0.0
      %874 = vmatprep.subr.mxu0 0.0
      %875 = vmatpush1.msra.mxu0 0.0
      %876 = vmatprep.subr.mxu0 0.0
      %877 = vmatpush1.msra.mxu0 0.0
      %878 = vmatprep.subr.mxu0 0.0
      %879 = vmatpush1.msra.mxu0 0.0
      %880 = vmatprep.subr.mxu0 0.0
      %881 = vmatpush1.msra.mxu0 0.0
      %882 = vmatprep.subr.mxu0 0.0
      %883 = vmatpush1.msra.mxu0 0.0
      %884 = vmatprep.subr.mxu0 0.0
      %885 = vmatpush1.msra.mxu0 0.0
      %886 = vmatprep.subr.mxu0 0.0
      %887 = vmatpush1.msra.mxu0 0.0
      %888 = vmatprep.subr.mxu0 0.0
      %889 = vmatpush1.msra.mxu0 0.0
      %890 = vmatprep.subr.mxu0 0.0
      %891 = vmatpush1.msra.mxu0 0.0
      %892 = vmatprep.subr.mxu0 0.0
      %893 = vmatpush1.msra.mxu0 0.0
      %894 = vmatprep.subr.mxu0 0.0
      %895 = vmatpush1.msra.mxu0 0.0
      %896 = vmatprep.subr.mxu0 0.0
      %897 = vmatpush1.msra.mxu0 0.0
      %898 = vmatprep.subr.mxu0 0.0
      %899 = vmatpush1.msra.mxu0 0.0
      %900 = vmatprep.mubr.f32.mxu0 0.0
      %901 = vmatmul.mubr.f32.gmra.mrb[0].mxu0 %v757
      %v902 = vpop.f32.mrb[0].mxu0
      %v903 = vadd.f32 0.0, %v902
      %v904 = vpop.f32.mrb[0].mxu0
      %905 = vdwg.mxu0
      %v906 = vadd.f32 %v739, %v832
      %v907 = vadd.f32 %v740, %v834
      %v908 = vadd.f32 %v741, %v903
      %v909 = vld [vmem:[#allocation2] sm:$0xff]
      %v910 = vld [vmem:[#allocation2 + $0x8] sm:$0xf]
      %v913 = vcombine.high %v909, %v909
      %914 = vrot.lane.b32.xlu0 %v909, 109
      %v915 = vpop.permute.xlu0 %914
      %916 = vrot.lane.b32.xlu0 %v913, 109
      %v917 = vpop.permute.xlu0 %916
      %918 = vrot.lane.b32.xlu0 %v910, 109
      %v919 = vpop.permute.xlu0 %918
      %vm920 = vcmask 891904
      %v921 = vsel %vm920, %v915, %v917
      %v922 = vsel %vm920, %v917, %v919
      %v924 = vsel %vm273, %v254, 0
      %v926 = vsel %vm277, %v921, 0
      %v928 = vsel %vm277, %v922, 0
      %v930 = vsel %vm277, %v919, 0
      %932 = vmatprep.subr.mxu0 %v928
      %933 = vmatpush1.msra.mxu0 %v926
      %934 = vmatprep.subr.mxu0 0.0
      %935 = vmatpush1.msra.mxu0 0.0
      %936 = vmatprep.subr.mxu0 0.0
      %937 = vmatpush1.msra.mxu0 0.0
      %938 = vmatprep.subr.mxu0 0.0
      %939 = vmatpush1.msra.mxu0 0.0
      %940 = vmatprep.subr.mxu0 0.0
      %941 = vmatpush1.msra.mxu0 0.0
      %942 = vmatprep.subr.mxu0 0.0
      %943 = vmatpush1.msra.mxu0 0.0
      %944 = vmatprep.subr.mxu0 0.0
      %945 = vmatpush1.msra.mxu0 0.0
      %946 = vmatprep.subr.mxu0 0.0
      %947 = vmatpush1.msra.mxu0 0.0
      %948 = vmatprep.subr.mxu0 0.0
      %949 = vmatpush1.msra.mxu0 0.0
      %950 = vmatprep.subr.mxu0 0.0
      %951 = vmatpush1.msra.mxu0 0.0
      %952 = vmatprep.subr.mxu0 0.0
      %953 = vmatpush1.msra.mxu0 0.0
      %954 = vmatprep.subr.mxu0 0.0
      %955 = vmatpush1.msra.mxu0 0.0
      %956 = vmatprep.subr.mxu0 0.0
      %957 = vmatpush1.msra.mxu0 0.0
      %958 = vmatprep.subr.mxu0 0.0
      %959 = vmatpush1.msra.mxu0 0.0
      %960 = vmatprep.subr.mxu0 0.0
      %961 = vmatpush1.msra.mxu0 0.0
      %962 = vmatprep.subr.mxu0 0.0
      %963 = vmatpush1.msra.mxu0 0.0
      %964 = vmatprep.subr.mxu0 0.0
      %965 = vmatpush1.msra.mxu0 0.0
      %966 = vmatprep.subr.mxu0 0.0
      %967 = vmatpush1.msra.mxu0 0.0
      %968 = vmatprep.subr.mxu0 0.0
      %969 = vmatpush1.msra.mxu0 0.0
      %970 = vmatprep.subr.mxu0 0.0
      %971 = vmatpush1.msra.mxu0 0.0
      %972 = vmatprep.subr.mxu0 0.0
      %973 = vmatpush1.msra.mxu0 0.0
      %974 = vmatprep.subr.mxu0 0.0
      %975 = vmatpush1.msra.mxu0 0.0
      %976 = vmatprep.subr.mxu0 0.0
      %977 = vmatpush1.msra.mxu0 0.0
      %978 = vmatprep.subr.mxu0 0.0
      %979 = vmatpush1.msra.mxu0 0.0
      %980 = vmatprep.subr.mxu0 0.0
      %981 = vmatpush1.msra.mxu0 0.0
      %982 = vmatprep.subr.mxu0 0.0
      %983 = vmatpush1.msra.mxu0 0.0
      %984 = vmatprep.subr.mxu0 0.0
      %985 = vmatpush1.msra.mxu0 0.0
      %986 = vmatprep.subr.mxu0 0.0
      %987 = vmatpush1.msra.mxu0 0.0
      %988 = vmatprep.subr.mxu0 0.0
      %989 = vmatpush1.msra.mxu0 0.0
      %990 = vmatprep.subr.mxu0 0.0
      %991 = vmatpush1.msra.mxu0 0.0
      %992 = vmatprep.subr.mxu0 0.0
      %993 = vmatpush1.msra.mxu0 0.0
      %994 = vmatprep.subr.mxu0 0.0
      %995 = vmatpush1.msra.mxu0 0.0
      %996 = vmatprep.mubr.f32.mxu0 0.0
      %997 = vmatmul.mubr.f32.gmra.mrb[0].mxu0 %v924
      %v998 = vpop.f32.mrb[0].mxu0
      %v999 = vadd.f32 0.0, %v998
      %v1000 = vpop.f32.mrb[0].mxu0
      %v1001 = vadd.f32 0.0, %v1000
      %1002 = vdwg.mxu0
      %1003 = vmatprep.subr.mxu0 0.0
      %1004 = vmatpush1.msra.mxu0 %v930
      %1005 = vmatprep.subr.mxu0 0.0
      %1006 = vmatpush1.msra.mxu0 0.0
      %1007 = vmatprep.subr.mxu0 0.0
      %1008 = vmatpush1.msra.mxu0 0.0
      %1009 = vmatprep.subr.mxu0 0.0
      %1010 = vmatpush1.msra.mxu0 0.0
      %1011 = vmatprep.subr.mxu0 0.0
      %1012 = vmatpush1.msra.mxu0 0.0
      %1013 = vmatprep.subr.mxu0 0.0
      %1014 = vmatpush1.msra.mxu0 0.0
      %1015 = vmatprep.subr.mxu0 0.0
      %1016 = vmatpush1.msra.mxu0 0.0
      %1017 = vmatprep.subr.mxu0 0.0
      %1018 = vmatpush1.msra.mxu0 0.0
      %1019 = vmatprep.subr.mxu0 0.0
      %1020 = vmatpush1.msra.mxu0 0.0
      %1021 = vmatprep.subr.mxu0 0.0
      %1022 = vmatpush1.msra.mxu0 0.0
      %1023 = vmatprep.subr.mxu0 0.0
      %1024 = vmatpush1.msra.mxu0 0.0
      %1025 = vmatprep.subr.mxu0 0.0
      %1026 = vmatpush1.msra.mxu0 0.0
      %1027 = vmatprep.subr.mxu0 0.0
      %1028 = vmatpush1.msra.mxu0 0.0
      %1029 = vmatprep.subr.mxu0 0.0
      %1030 = vmatpush1.msra.mxu0 0.0
      %1031 = vmatprep.subr.mxu0 0.0
      %1032 = vmatpush1.msra.mxu0 0.0
      %1033 = vmatprep.subr.mxu0 0.0
      %1034 = vmatpush1.msra.mxu0 0.0
      %1035 = vmatprep.subr.mxu0 0.0
      %1036 = vmatpush1.msra.mxu0 0.0
      %1037 = vmatprep.subr.mxu0 0.0
      %1038 = vmatpush1.msra.mxu0 0.0
      %1039 = vmatprep.subr.mxu0 0.0
      %1040 = vmatpush1.msra.mxu0 0.0
      %1041 = vmatprep.subr.mxu0 0.0
      %1042 = vmatpush1.msra.mxu0 0.0
      %1043 = vmatprep.subr.mxu0 0.0
      %1044 = vmatpush1.msra.mxu0 0.0
      %1045 = vmatprep.subr.mxu0 0.0
      %1046 = vmatpush1.msra.mxu0 0.0
      %1047 = vmatprep.subr.mxu0 0.0
      %1048 = vmatpush1.msra.mxu0 0.0
      %1049 = vmatprep.subr.mxu0 0.0
      %1050 = vmatpush1.msra.mxu0 0.0
      %1051 = vmatprep.subr.mxu0 0.0
      %1052 = vmatpush1.msra.mxu0 0.0
      %1053 = vmatprep.subr.mxu0 0.0
      %1054 = vmatpush1.msra.mxu0 0.0
      %1055 = vmatprep.subr.mxu0 0.0
      %1056 = vmatpush1.msra.mxu0 0.0
      %1057 = vmatprep.subr.mxu0 0.0
      %1058 = vmatpush1.msra.mxu0 0.0
      %1059 = vmatprep.subr.mxu0 0.0
      %1060 = vmatpush1.msra.mxu0 0.0
      %1061 = vmatprep.subr.mxu0 0.0
      %1062 = vmatpush1.msra.mxu0 0.0
      %1063 = vmatprep.subr.mxu0 0.0
      %1064 = vmatpush1.msra.mxu0 0.0
      %1065 = vmatprep.subr.mxu0 0.0
      %1066 = vmatpush1.msra.mxu0 0.0
      %1067 = vmatprep.mubr.f32.mxu0 0.0
      %1068 = vmatmul.mubr.f32.gmra.mrb[0].mxu0 %v924
      %v1069 = vpop.f32.mrb[0].mxu0
      %v1070 = vadd.f32 0.0, %v1069
      %v1071 = vpop.f32.mrb[0].mxu0
      %1072 = vdwg.mxu0
      %v1073 = vadd.f32 %v906, %v999
      %v1074 = vadd.f32 %v907, %v1001
      %v1075 = vadd.f32 %v908, %v1070
      %v1076 = vld [vmem:[#allocation2] sm:$0xff]
      %v1077 = vld [vmem:[#allocation2 + $0x8] sm:$0xf]
      %v1080 = vcombine.high %v1076, %v1076
      %1081 = vrot.lane.b32.xlu0 %v1076, 108
      %v1082 = vpop.permute.xlu0 %1081
      %1083 = vrot.lane.b32.xlu0 %v1080, 108
      %v1084 = vpop.permute.xlu0 %1083
      %1085 = vrot.lane.b32.xlu0 %v1077, 108
      %v1086 = vpop.permute.xlu0 %1085
      %vm1087 = vcmask 883712
      %v1088 = vsel %vm1087, %v1082, %v1084
      %v1089 = vsel %vm1087, %v1084, %v1086
      %v1091 = vsel %vm273, %v255, 0
      %v1093 = vsel %vm277, %v1088, 0
      %v1095 = vsel %vm277, %v1089, 0
      %v1097 = vsel %vm277, %v1086, 0
      %1099 = vmatprep.subr.mxu0 %v1095
      %1100 = vmatpush1.msra.mxu0 %v1093
      %1101 = vmatprep.subr.mxu0 0.0
      %1102 = vmatpush1.msra.mxu0 0.0
      %1103 = vmatprep.subr.mxu0 0.0
      %1104 = vmatpush1.msra.mxu0 0.0
      %1105 = vmatprep.subr.mxu0 0.0
      %1106 = vmatpush1.msra.mxu0 0.0
      %1107 = vmatprep.subr.mxu0 0.0
      %1108 = vmatpush1.msra.mxu0 0.0
      %1109 = vmatprep.subr.mxu0 0.0
      %1110 = vmatpush1.msra.mxu0 0.0
      %1111 = vmatprep.subr.mxu0 0.0
      %1112 = vmatpush1.msra.mxu0 0.0
      %1113 = vmatprep.subr.mxu0 0.0
      %1114 = vmatpush1.msra.mxu0 0.0
      %1115 = vmatprep.subr.mxu0 0.0
      %1116 = vmatpush1.msra.mxu0 0.0
      %1117 = vmatprep.subr.mxu0 0.0
      %1118 = vmatpush1.msra.mxu0 0.0
      %1119 = vmatprep.subr.mxu0 0.0
      %1120 = vmatpush1.msra.mxu0 0.0
      %1121 = vmatprep.subr.mxu0 0.0
      %1122 = vmatpush1.msra.mxu0 0.0
      %1123 = vmatprep.subr.mxu0 0.0
      %1124 = vmatpush1.msra.mxu0 0.0
      %1125 = vmatprep.subr.mxu0 0.0
      %1126 = vmatpush1.msra.mxu0 0.0
      %1127 = vmatprep.subr.mxu0 0.0
      %1128 = vmatpush1.msra.mxu0 0.0
      %1129 = vmatprep.subr.mxu0 0.0
      %1130 = vmatpush1.msra.mxu0 0.0
      %1131 = vmatprep.subr.mxu0 0.0
      %1132 = vmatpush1.msra.mxu0 0.0
      %1133 = vmatprep.subr.mxu0 0.0
      %1134 = vmatpush1.msra.mxu0 0.0
      %1135 = vmatprep.subr.mxu0 0.0
      %1136 = vmatpush1.msra.mxu0 0.0
      %1137 = vmatprep.subr.mxu0 0.0
      %1138 = vmatpush1.msra.mxu0 0.0
      %1139 = vmatprep.subr.mxu0 0.0
      %1140 = vmatpush1.msra.mxu0 0.0
      %1141 = vmatprep.subr.mxu0 0.0
      %1142 = vmatpush1.msra.mxu0 0.0
      %1143 = vmatprep.subr.mxu0 0.0
      %1144 = vmatpush1.msra.mxu0 0.0
      %1145 = vmatprep.subr.mxu0 0.0
      %1146 = vmatpush1.msra.mxu0 0.0
      %1147 = vmatprep.subr.mxu0 0.0
      %1148 = vmatpush1.msra.mxu0 0.0
      %1149 = vmatprep.subr.mxu0 0.0
      %1150 = vmatpush1.msra.mxu0 0.0
      %1151 = vmatprep.subr.mxu0 0.0
      %1152 = vmatpush1.msra.mxu0 0.0
      %1153 = vmatprep.subr.mxu0 0.0
      %1154 = vmatpush1.msra.mxu0 0.0
      %1155 = vmatprep.subr.mxu0 0.0
      %1156 = vmatpush1.msra.mxu0 0.0
      %1157 = vmatprep.subr.mxu0 0.0
      %1158 = vmatpush1.msra.mxu0 0.0
      %1159 = vmatprep.subr.mxu0 0.0
      %1160 = vmatpush1.msra.mxu0 0.0
      %1161 = vmatprep.subr.mxu0 0.0
      %1162 = vmatpush1.msra.mxu0 0.0
      %1163 = vmatprep.mubr.f32.mxu0 0.0
      %1164 = vmatmul.mubr.f32.gmra.mrb[0].mxu0 %v1091
      %v1165 = vpop.f32.mrb[0].mxu0
      %v1166 = vadd.f32 0.0, %v1165
      %v1167 = vpop.f32.mrb[0].mxu0
      %v1168 = vadd.f32 0.0, %v1167
      %1169 = vdwg.mxu0
      %1170 = vmatprep.subr.mxu0 0.0
      %1171 = vmatpush1.msra.mxu0 %v1097
      %1172 = vmatprep.subr.mxu0 0.0
      %1173 = vmatpush1.msra.mxu0 0.0
      %1174 = vmatprep.subr.mxu0 0.0
      %1175 = vmatpush1.msra.mxu0 0.0
      %1176 = vmatprep.subr.mxu0 0.0
      %1177 = vmatpush1.msra.mxu0 0.0
      %1178 = vmatprep.subr.mxu0 0.0
      %1179 = vmatpush1.msra.mxu0 0.0
      %1180 = vmatprep.subr.mxu0 0.0
      %1181 = vmatpush1.msra.mxu0 0.0
      %1182 = vmatprep.subr.mxu0 0.0
      %1183 = vmatpush1.msra.mxu0 0.0
      %1184 = vmatprep.subr.mxu0 0.0
      %1185 = vmatpush1.msra.mxu0 0.0
      %1186 = vmatprep.subr.mxu0 0.0
      %1187 = vmatpush1.msra.mxu0 0.0
      %1188 = vmatprep.subr.mxu0 0.0
      %1189 = vmatpush1.msra.mxu0 0.0
      %1190 = vmatprep.subr.mxu0 0.0
      %1191 = vmatpush1.msra.mxu0 0.0
      %1192 = vmatprep.subr.mxu0 0.0
      %1193 = vmatpush1.msra.mxu0 0.0
      %1194 = vmatprep.subr.mxu0 0.0
      %1195 = vmatpush1.msra.mxu0 0.0
      %1196 = vmatprep.subr.mxu0 0.0
      %1197 = vmatpush1.msra.mxu0 0.0
      %1198 = vmatprep.subr.mxu0 0.0
      %1199 = vmatpush1.msra.mxu0 0.0
      %1200 = vmatprep.subr.mxu0 0.0
      %1201 = vmatpush1.msra.mxu0 0.0
      %1202 = vmatprep.subr.mxu0 0.0
      %1203 = vmatpush1.msra.mxu0 0.0
      %1204 = vmatprep.subr.mxu0 0.0
      %1205 = vmatpush1.msra.mxu0 0.0
      %1206 = vmatprep.subr.mxu0 0.0
      %1207 = vmatpush1.msra.mxu0 0.0
      %1208 = vmatprep.subr.mxu0 0.0
      %1209 = vmatpush1.msra.mxu0 0.0
      %1210 = vmatprep.subr.mxu0 0.0
      %1211 = vmatpush1.msra.mxu0 0.0
      %1212 = vmatprep.subr.mxu0 0.0
      %1213 = vmatpush1.msra.mxu0 0.0
      %1214 = vmatprep.subr.mxu0 0.0
      %1215 = vmatpush1.msra.mxu0 0.0
      %1216 = vmatprep.subr.mxu0 0.0
      %1217 = vmatpush1.msra.mxu0 0.0
      %1218 = vmatprep.subr.mxu0 0.0
      %1219 = vmatpush1.msra.mxu0 0.0
      %1220 = vmatprep.subr.mxu0 0.0
      %1221 = vmatpush1.msra.mxu0 0.0
      %1222 = vmatprep.subr.mxu0 0.0
      %1223 = vmatpush1.msra.mxu0 0.0
      %1224 = vmatprep.subr.mxu0 0.0
      %1225 = vmatpush1.msra.mxu0 0.0
      %1226 = vmatprep.subr.mxu0 0.0
      %1227 = vmatpush1.msra.mxu0 0.0
      %1228 = vmatprep.subr.mxu0 0.0
      %1229 = vmatpush1.msra.mxu0 0.0
      %1230 = vmatprep.subr.mxu0 0.0
      %1231 = vmatpush1.msra.mxu0 0.0
      %1232 = vmatprep.subr.mxu0 0.0
      %1233 = vmatpush1.msra.mxu0 0.0
      %1234 = vmatprep.mubr.f32.mxu0 0.0
      %1235 = vmatmul.mubr.f32.gmra.mrb[0].mxu0 %v1091
      %v1236 = vpop.f32.mrb[0].mxu0
      %v1237 = vadd.f32 0.0, %v1236
      %v1238 = vpop.f32.mrb[0].mxu0
      %1239 = vdwg.mxu0
      %v1240 = vadd.f32 %v1073, %v1166
      %v1241 = vadd.f32 %v1074, %v1168
      %v1242 = vadd.f32 %v1075, %v1237
      %v1243 = vld [vmem:[#allocation2] sm:$0xff]
      %v1244 = vld [vmem:[#allocation2 + $0x8] sm:$0xf]
      %v1247 = vcombine.high %v1243, %v1243
      %1248 = vrot.lane.b32.xlu0 %v1243, 92
      %v1249 = vpop.permute.xlu0 %1248
      %1250 = vrot.lane.b32.xlu0 %v1247, 92
      %v1251 = vpop.permute.xlu0 %1250
      %1252 = vrot.lane.b32.xlu0 %v1244, 92
      %v1253 = vpop.permute.xlu0 %1252
      %vm1254 = vcmask 752640
      %v1255 = vsel %vm1254, %v1249, %v1251
      %v1256 = vsel %vm1254, %v1251, %v1253
      %v1258 = vsel %vm273, %v256, 0
      %v1260 = vsel %vm277, %v1255, 0
      %v1262 = vsel %vm277, %v1256, 0
      %v1264 = vsel %vm277, %v1253, 0
      %1266 = vmatprep.subr.mxu0 %v1262
      %1267 = vmatpush1.msra.mxu0 %v1260
      %1268 = vmatprep.subr.mxu0 0.0
      %1269 = vmatpush1.msra.mxu0 0.0
      %1270 = vmatprep.subr.mxu0 0.0
      %1271 = vmatpush1.msra.mxu0 0.0
      %1272 = vmatprep.subr.mxu0 0.0
      %1273 = vmatpush1.msra.mxu0 0.0
      %1274 = vmatprep.subr.mxu0 0.0
      %1275 = vmatpush1.msra.mxu0 0.0
      %1276 = vmatprep.subr.mxu0 0.0
      %1277 = vmatpush1.msra.mxu0 0.0
      %1278 = vmatprep.subr.mxu0 0.0
      %1279 = vmatpush1.msra.mxu0 0.0
      %1280 = vmatprep.subr.mxu0 0.0
      %1281 = vmatpush1.msra.mxu0 0.0
      %1282 = vmatprep.subr.mxu0 0.0
      %1283 = vmatpush1.msra.mxu0 0.0
      %1284 = vmatprep.subr.mxu0 0.0
      %1285 = vmatpush1.msra.mxu0 0.0
      %1286 = vmatprep.subr.mxu0 0.0
      %1287 = vmatpush1.msra.mxu0 0.0
      %1288 = vmatprep.subr.mxu0 0.0
      %1289 = vmatpush1.msra.mxu0 0.0
      %1290 = vmatprep.subr.mxu0 0.0
      %1291 = vmatpush1.msra.mxu0 0.0
      %1292 = vmatprep.subr.mxu0 0.0
      %1293 = vmatpush1.msra.mxu0 0.0
      %1294 = vmatprep.subr.mxu0 0.0
      %1295 = vmatpush1.msra.mxu0 0.0
      %1296 = vmatprep.subr.mxu0 0.0
      %1297 = vmatpush1.msra.mxu0 0.0
      %1298 = vmatprep.subr.mxu0 0.0
      %1299 = vmatpush1.msra.mxu0 0.0
      %1300 = vmatprep.subr.mxu0 0.0
      %1301 = vmatpush1.msra.mxu0 0.0
      %1302 = vmatprep.subr.mxu0 0.0
      %1303 = vmatpush1.msra.mxu0 0.0
      %1304 = vmatprep.subr.mxu0 0.0
      %1305 = vmatpush1.msra.mxu0 0.0
      %1306 = vmatprep.subr.mxu0 0.0
      %1307 = vmatpush1.msra.mxu0 0.0
      %1308 = vmatprep.subr.mxu0 0.0
      %1309 = vmatpush1.msra.mxu0 0.0
      %1310 = vmatprep.subr.mxu0 0.0
      %1311 = vmatpush1.msra.mxu0 0.0
      %1312 = vmatprep.subr.mxu0 0.0
      %1313 = vmatpush1.msra.mxu0 0.0
      %1314 = vmatprep.subr.mxu0 0.0
      %1315 = vmatpush1.msra.mxu0 0.0
      %1316 = vmatprep.subr.mxu0 0.0
      %1317 = vmatpush1.msra.mxu0 0.0
      %1318 = vmatprep.subr.mxu0 0.0
      %1319 = vmatpush1.msra.mxu0 0.0
      %1320 = vmatprep.subr.mxu0 0.0
      %1321 = vmatpush1.msra.mxu0 0.0
      %1322 = vmatprep.subr.mxu0 0.0
      %1323 = vmatpush1.msra.mxu0 0.0
      %1324 = vmatprep.subr.mxu0 0.0
      %1325 = vmatpush1.msra.mxu0 0.0
      %1326 = vmatprep.subr.mxu0 0.0
      %1327 = vmatpush1.msra.mxu0 0.0
      %1328 = vmatprep.subr.mxu0 0.0
      %1329 = vmatpush1.msra.mxu0 0.0
      %1330 = vmatprep.mubr.f32.mxu0 0.0
      %1331 = vmatmul.mubr.f32.gmra.mrb[0].mxu0 %v1258
      %v1332 = vpop.f32.mrb[0].mxu0
      %v1333 = vadd.f32 0.0, %v1332
      %v1334 = vpop.f32.mrb[0].mxu0
      %v1335 = vadd.f32 0.0, %v1334
      %1336 = vdwg.mxu0
      %1337 = vmatprep.subr.mxu0 0.0
      %1338 = vmatpush1.msra.mxu0 %v1264
      %1339 = vmatprep.subr.mxu0 0.0
      %1340 = vmatpush1.msra.mxu0 0.0
      %1341 = vmatprep.subr.mxu0 0.0
      %1342 = vmatpush1.msra.mxu0 0.0
      %1343 = vmatprep.subr.mxu0 0.0
      %1344 = vmatpush1.msra.mxu0 0.0
      %1345 = vmatprep.subr.mxu0 0.0
      %1346 = vmatpush1.msra.mxu0 0.0
      %1347 = vmatprep.subr.mxu0 0.0
      %1348 = vmatpush1.msra.mxu0 0.0
      %1349 = vmatprep.subr.mxu0 0.0
      %1350 = vmatpush1.msra.mxu0 0.0
      %1351 = vmatprep.subr.mxu0 0.0
      %1352 = vmatpush1.msra.mxu0 0.0
      %1353 = vmatprep.subr.mxu0 0.0
      %1354 = vmatpush1.msra.mxu0 0.0
      %1355 = vmatprep.subr.mxu0 0.0
      %1356 = vmatpush1.msra.mxu0 0.0
      %1357 = vmatprep.subr.mxu0 0.0
      %1358 = vmatpush1.msra.mxu0 0.0
      %1359 = vmatprep.subr.mxu0 0.0
      %1360 = vmatpush1.msra.mxu0 0.0
      %1361 = vmatprep.subr.mxu0 0.0
      %1362 = vmatpush1.msra.mxu0 0.0
      %1363 = vmatprep.subr.mxu0 0.0
      %1364 = vmatpush1.msra.mxu0 0.0
      %1365 = vmatprep.subr.mxu0 0.0
      %1366 = vmatpush1.msra.mxu0 0.0
      %1367 = vmatprep.subr.mxu0 0.0
      %1368 = vmatpush1.msra.mxu0 0.0
      %1369 = vmatprep.subr.mxu0 0.0
      %1370 = vmatpush1.msra.mxu0 0.0
      %1371 = vmatprep.subr.mxu0 0.0
      %1372 = vmatpush1.msra.mxu0 0.0
      %1373 = vmatprep.subr.mxu0 0.0
      %1374 = vmatpush1.msra.mxu0 0.0
      %1375 = vmatprep.subr.mxu0 0.0
      %1376 = vmatpush1.msra.mxu0 0.0
      %1377 = vmatprep.subr.mxu0 0.0
      %1378 = vmatpush1.msra.mxu0 0.0
      %1379 = vmatprep.subr.mxu0 0.0
      %1380 = vmatpush1.msra.mxu0 0.0
      %1381 = vmatprep.subr.mxu0 0.0
      %1382 = vmatpush1.msra.mxu0 0.0
      %1383 = vmatprep.subr.mxu0 0.0
      %1384 = vmatpush1.msra.mxu0 0.0
      %1385 = vmatprep.subr.mxu0 0.0
      %1386 = vmatpush1.msra.mxu0 0.0
      %1387 = vmatprep.subr.mxu0 0.0
      %1388 = vmatpush1.msra.mxu0 0.0
      %1389 = vmatprep.subr.mxu0 0.0
      %1390 = vmatpush1.msra.mxu0 0.0
      %1391 = vmatprep.subr.mxu0 0.0
      %1392 = vmatpush1.msra.mxu0 0.0
      %1393 = vmatprep.subr.mxu0 0.0
      %1394 = vmatpush1.msra.mxu0 0.0
      %1395 = vmatprep.subr.mxu0 0.0
      %1396 = vmatpush1.msra.mxu0 0.0
      %1397 = vmatprep.subr.mxu0 0.0
      %1398 = vmatpush1.msra.mxu0 0.0
      %1399 = vmatprep.subr.mxu0 0.0
      %1400 = vmatpush1.msra.mxu0 0.0
      %1401 = vmatprep.mubr.f32.mxu0 0.0
      %1402 = vmatmul.mubr.f32.gmra.mrb[0].mxu0 %v1258
      %v1403 = vpop.f32.mrb[0].mxu0
      %v1404 = vadd.f32 0.0, %v1403
      %v1405 = vpop.f32.mrb[0].mxu0
      %1406 = vdwg.mxu0
      %v1407 = vadd.f32 %v1240, %v1333
      %v1408 = vadd.f32 %v1241, %v1335
      %v1409 = vadd.f32 %v1242, %v1404
      %v1410 = vld [vmem:[#allocation2] sm:$0xff]
      %v1411 = vld [vmem:[#allocation2 + $0x8] sm:$0xf]
      %v1414 = vcombine.high %v1410, %v1410
      %1415 = vrot.lane.b32.xlu0 %v1410, 91
      %v1416 = vpop.permute.xlu0 %1415
      %1417 = vrot.lane.b32.xlu0 %v1414, 91
      %v1418 = vpop.permute.xlu0 %1417
      %1419 = vrot.lane.b32.xlu0 %v1411, 91
      %v1420 = vpop.permute.xlu0 %1419
      %vm1421 = vcmask 744448
      %v1422 = vsel %vm1421, %v1416, %v1418
      %v1423 = vsel %vm1421, %v1418, %v1420
      %v1425 = vsel %vm273, %v257, 0
      %v1427 = vsel %vm277, %v1422, 0
      %v1429 = vsel %vm277, %v1423, 0
      %v1431 = vsel %vm277, %v1420, 0
      %1433 = vmatprep.subr.mxu0 %v1429
      %1434 = vmatpush1.msra.mxu0 %v1427
      %1435 = vmatprep.subr.mxu0 0.0
      %1436 = vmatpush1.msra.mxu0 0.0
      %1437 = vmatprep.subr.mxu0 0.0
      %1438 = vmatpush1.msra.mxu0 0.0
      %1439 = vmatprep.subr.mxu0 0.0
      %1440 = vmatpush1.msra.mxu0 0.0
      %1441 = vmatprep.subr.mxu0 0.0
      %1442 = vmatpush1.msra.mxu0 0.0
      %1443 = vmatprep.subr.mxu0 0.0
      %1444 = vmatpush1.msra.mxu0 0.0
      %1445 = vmatprep.subr.mxu0 0.0
      %1446 = vmatpush1.msra.mxu0 0.0
      %1447 = vmatprep.subr.mxu0 0.0
      %1448 = vmatpush1.msra.mxu0 0.0
      %1449 = vmatprep.subr.mxu0 0.0
      %1450 = vmatpush1.msra.mxu0 0.0
      %1451 = vmatprep.subr.mxu0 0.0
      %1452 = vmatpush1.msra.mxu0 0.0
      %1453 = vmatprep.subr.mxu0 0.0
      %1454 = vmatpush1.msra.mxu0 0.0
      %1455 = vmatprep.subr.mxu0 0.0
      %1456 = vmatpush1.msra.mxu0 0.0
      %1457 = vmatprep.subr.mxu0 0.0
      %1458 = vmatpush1.msra.mxu0 0.0
      %1459 = vmatprep.subr.mxu0 0.0
      %1460 = vmatpush1.msra.mxu0 0.0
      %1461 = vmatprep.subr.mxu0 0.0
      %1462 = vmatpush1.msra.mxu0 0.0
      %1463 = vmatprep.subr.mxu0 0.0
      %1464 = vmatpush1.msra.mxu0 0.0
      %1465 = vmatprep.subr.mxu0 0.0
      %1466 = vmatpush1.msra.mxu0 0.0
      %1467 = vmatprep.subr.mxu0 0.0
      %1468 = vmatpush1.msra.mxu0 0.0
      %1469 = vmatprep.subr.mxu0 0.0
      %1470 = vmatpush1.msra.mxu0 0.0
      %1471 = vmatprep.subr.mxu0 0.0
      %1472 = vmatpush1.msra.mxu0 0.0
      %1473 = vmatprep.subr.mxu0 0.0
      %1474 = vmatpush1.msra.mxu0 0.0
      %1475 = vmatprep.subr.mxu0 0.0
      %1476 = vmatpush1.msra.mxu0 0.0
      %1477 = vmatprep.subr.mxu0 0.0
      %1478 = vmatpush1.msra.mxu0 0.0
      %1479 = vmatprep.subr.mxu0 0.0
      %1480 = vmatpush1.msra.mxu0 0.0
      %1481 = vmatprep.subr.mxu0 0.0
      %1482 = vmatpush1.msra.mxu0 0.0
      %1483 = vmatprep.subr.mxu0 0.0
      %1484 = vmatpush1.msra.mxu0 0.0
      %1485 = vmatprep.subr.mxu0 0.0
      %1486 = vmatpush1.msra.mxu0 0.0
      %1487 = vmatprep.subr.mxu0 0.0
      %1488 = vmatpush1.msra.mxu0 0.0
      %1489 = vmatprep.subr.mxu0 0.0
      %1490 = vmatpush1.msra.mxu0 0.0
      %1491 = vmatprep.subr.mxu0 0.0
      %1492 = vmatpush1.msra.mxu0 0.0
      %1493 = vmatprep.subr.mxu0 0.0
      %1494 = vmatpush1.msra.mxu0 0.0
      %1495 = vmatprep.subr.mxu0 0.0
      %1496 = vmatpush1.msra.mxu0 0.0
      %1497 = vmatprep.mubr.f32.mxu0 0.0
      %1498 = vmatmul.mubr.f32.gmra.mrb[0].mxu0 %v1425
      %v1499 = vpop.f32.mrb[0].mxu0
      %v1500 = vadd.f32 0.0, %v1499
      %v1501 = vpop.f32.mrb[0].mxu0
      %v1502 = vadd.f32 0.0, %v1501
      %1503 = vdwg.mxu0
      %1504 = vmatprep.subr.mxu0 0.0
      %1505 = vmatpush1.msra.mxu0 %v1431
      %1506 = vmatprep.subr.mxu0 0.0
      %1507 = vmatpush1.msra.mxu0 0.0
      %1508 = vmatprep.subr.mxu0 0.0
      %1509 = vmatpush1.msra.mxu0 0.0
      %1510 = vmatprep.subr.mxu0 0.0
      %1511 = vmatpush1.msra.mxu0 0.0
      %1512 = vmatprep.subr.mxu0 0.0
      %1513 = vmatpush1.msra.mxu0 0.0
      %1514 = vmatprep.subr.mxu0 0.0
      %1515 = vmatpush1.msra.mxu0 0.0
      %1516 = vmatprep.subr.mxu0 0.0
      %1517 = vmatpush1.msra.mxu0 0.0
      %1518 = vmatprep.subr.mxu0 0.0
      %1519 = vmatpush1.msra.mxu0 0.0
      %1520 = vmatprep.subr.mxu0 0.0
      %1521 = vmatpush1.msra.mxu0 0.0
      %1522 = vmatprep.subr.mxu0 0.0
      %1523 = vmatpush1.msra.mxu0 0.0
      %1524 = vmatprep.subr.mxu0 0.0
      %1525 = vmatpush1.msra.mxu0 0.0
      %1526 = vmatprep.subr.mxu0 0.0
      %1527 = vmatpush1.msra.mxu0 0.0
      %1528 = vmatprep.subr.mxu0 0.0
      %1529 = vmatpush1.msra.mxu0 0.0
      %1530 = vmatprep.subr.mxu0 0.0
      %1531 = vmatpush1.msra.mxu0 0.0
      %1532 = vmatprep.subr.mxu0 0.0
      %1533 = vmatpush1.msra.mxu0 0.0
      %1534 = vmatprep.subr.mxu0 0.0
      %1535 = vmatpush1.msra.mxu0 0.0
      %1536 = vmatprep.subr.mxu0 0.0
      %1537 = vmatpush1.msra.mxu0 0.0
      %1538 = vmatprep.subr.mxu0 0.0
      %1539 = vmatpush1.msra.mxu0 0.0
      %1540 = vmatprep.subr.mxu0 0.0
      %1541 = vmatpush1.msra.mxu0 0.0
      %1542 = vmatprep.subr.mxu0 0.0
      %1543 = vmatpush1.msra.mxu0 0.0
      %1544 = vmatprep.subr.mxu0 0.0
      %1545 = vmatpush1.msra.mxu0 0.0
      %1546 = vmatprep.subr.mxu0 0.0
      %1547 = vmatpush1.msra.mxu0 0.0
      %1548 = vmatprep.subr.mxu0 0.0
      %1549 = vmatpush1.msra.mxu0 0.0
      %1550 = vmatprep.subr.mxu0 0.0
      %1551 = vmatpush1.msra.mxu0 0.0
      %1552 = vmatprep.subr.mxu0 0.0
      %1553 = vmatpush1.msra.mxu0 0.0
      %1554 = vmatprep.subr.mxu0 0.0
      %1555 = vmatpush1.msra.mxu0 0.0
      %1556 = vmatprep.subr.mxu0 0.0
      %1557 = vmatpush1.msra.mxu0 0.0
      %1558 = vmatprep.subr.mxu0 0.0
      %1559 = vmatpush1.msra.mxu0 0.0
      %1560 = vmatprep.subr.mxu0 0.0
      %1561 = vmatpush1.msra.mxu0 0.0
      %1562 = vmatprep.subr.mxu0 0.0
      %1563 = vmatpush1.msra.mxu0 0.0
      %1564 = vmatprep.subr.mxu0 0.0
      %1565 = vmatpush1.msra.mxu0 0.0
      %1566 = vmatprep.subr.mxu0 0.0
      %1567 = vmatpush1.msra.mxu0 0.0
      %1568 = vmatprep.mubr.f32.mxu0 0.0
      %1569 = vmatmul.mubr.f32.gmra.mrb[0].mxu0 %v1425
      %v1570 = vpop.f32.mrb[0].mxu0
      %v1571 = vadd.f32 0.0, %v1570
      %v1572 = vpop.f32.mrb[0].mxu0
      %1573 = vdwg.mxu0
      %v1574 = vadd.f32 %v1407, %v1500
      %v1575 = vadd.f32 %v1408, %v1502
      %v1576 = vadd.f32 %v1409, %v1571
      %v1577 = vld [vmem:[#allocation2] sm:$0xff]
      %v1578 = vld [vmem:[#allocation2 + $0x8] sm:$0xf]
      %v1581 = vcombine.high %v1577, %v1577
      %1582 = vrot.lane.b32.xlu0 %v1577, 90
      %v1583 = vpop.permute.xlu0 %1582
      %1584 = vrot.lane.b32.xlu0 %v1581, 90
      %v1585 = vpop.permute.xlu0 %1584
      %1586 = vrot.lane.b32.xlu0 %v1578, 90
      %v1587 = vpop.permute.xlu0 %1586
      %vm1588 = vcmask 736256
      %v1589 = vsel %vm1588, %v1583, %v1585
      %v1590 = vsel %vm1588, %v1585, %v1587
      %v1592 = vsel %vm273, %v258, 0
      %v1594 = vsel %vm277, %v1589, 0
      %v1596 = vsel %vm277, %v1590, 0
      %v1598 = vsel %vm277, %v1587, 0
      %1600 = vmatprep.subr.mxu0 %v1596
      %1601 = vmatpush1.msra.mxu0 %v1594
      %1602 = vmatprep.subr.mxu0 0.0
      %1603 = vmatpush1.msra.mxu0 0.0
      %1604 = vmatprep.subr.mxu0 0.0
      %1605 = vmatpush1.msra.mxu0 0.0
      %1606 = vmatprep.subr.mxu0 0.0
      %1607 = vmatpush1.msra.mxu0 0.0
      %1608 = vmatprep.subr.mxu0 0.0
      %1609 = vmatpush1.msra.mxu0 0.0
      %1610 = vmatprep.subr.mxu0 0.0
      %1611 = vmatpush1.msra.mxu0 0.0
      %1612 = vmatprep.subr.mxu0 0.0
      %1613 = vmatpush1.msra.mxu0 0.0
      %1614 = vmatprep.subr.mxu0 0.0
      %1615 = vmatpush1.msra.mxu0 0.0
      %1616 = vmatprep.subr.mxu0 0.0
      %1617 = vmatpush1.msra.mxu0 0.0
      %1618 = vmatprep.subr.mxu0 0.0
      %1619 = vmatpush1.msra.mxu0 0.0
      %1620 = vmatprep.subr.mxu0 0.0
      %1621 = vmatpush1.msra.mxu0 0.0
      %1622 = vmatprep.subr.mxu0 0.0
      %1623 = vmatpush1.msra.mxu0 0.0
      %1624 = vmatprep.subr.mxu0 0.0
      %1625 = vmatpush1.msra.mxu0 0.0
      %1626 = vmatprep.subr.mxu0 0.0
      %1627 = vmatpush1.msra.mxu0 0.0
      %1628 = vmatprep.subr.mxu0 0.0
      %1629 = vmatpush1.msra.mxu0 0.0
      %1630 = vmatprep.subr.mxu0 0.0
      %1631 = vmatpush1.msra.mxu0 0.0
      %1632 = vmatprep.subr.mxu0 0.0
      %1633 = vmatpush1.msra.mxu0 0.0
      %1634 = vmatprep.subr.mxu0 0.0
      %1635 = vmatpush1.msra.mxu0 0.0
      %1636 = vmatprep.subr.mxu0 0.0
      %1637 = vmatpush1.msra.mxu0 0.0
      %1638 = vmatprep.subr.mxu0 0.0
      %1639 = vmatpush1.msra.mxu0 0.0
      %1640 = vmatprep.subr.mxu0 0.0
      %1641 = vmatpush1.msra.mxu0 0.0
      %1642 = vmatprep.subr.mxu0 0.0
      %1643 = vmatpush1.msra.mxu0 0.0
      %1644 = vmatprep.subr.mxu0 0.0
      %1645 = vmatpush1.msra.mxu0 0.0
      %1646 = vmatprep.subr.mxu0 0.0
      %1647 = vmatpush1.msra.mxu0 0.0
      %1648 = vmatprep.subr.mxu0 0.0
      %1649 = vmatpush1.msra.mxu0 0.0
      %1650 = vmatprep.subr.mxu0 0.0
      %1651 = vmatpush1.msra.mxu0 0.0
      %1652 = vmatprep.subr.mxu0 0.0
      %1653 = vmatpush1.msra.mxu0 0.0
      %1654 = vmatprep.subr.mxu0 0.0
      %1655 = vmatpush1.msra.mxu0 0.0
      %1656 = vmatprep.subr.mxu0 0.0
      %1657 = vmatpush1.msra.mxu0 0.0
      %1658 = vmatprep.subr.mxu0 0.0
      %1659 = vmatpush1.msra.mxu0 0.0
      %1660 = vmatprep.subr.mxu0 0.0
      %1661 = vmatpush1.msra.mxu0 0.0
      %1662 = vmatprep.subr.mxu0 0.0
      %1663 = vmatpush1.msra.mxu0 0.0
      %1664 = vmatprep.mubr.f32.mxu0 0.0
      %1665 = vmatmul.mubr.f32.gmra.mrb[0].mxu0 %v1592
      %v1666 = vpop.f32.mrb[0].mxu0
      %v1667 = vadd.f32 0.0, %v1666
      %v1668 = vpop.f32.mrb[0].mxu0
      %v1669 = vadd.f32 0.0, %v1668
      %1670 = vdwg.mxu0
      %1671 = vmatprep.subr.mxu0 0.0
      %1672 = vmatpush1.msra.mxu0 %v1598
      %1673 = vmatprep.subr.mxu0 0.0
      %1674 = vmatpush1.msra.mxu0 0.0
      %1675 = vmatprep.subr.mxu0 0.0
      %1676 = vmatpush1.msra.mxu0 0.0
      %1677 = vmatprep.subr.mxu0 0.0
      %1678 = vmatpush1.msra.mxu0 0.0
      %1679 = vmatprep.subr.mxu0 0.0
      %1680 = vmatpush1.msra.mxu0 0.0
      %1681 = vmatprep.subr.mxu0 0.0
      %1682 = vmatpush1.msra.mxu0 0.0
      %1683 = vmatprep.subr.mxu0 0.0
      %1684 = vmatpush1.msra.mxu0 0.0
      %1685 = vmatprep.subr.mxu0 0.0
      %1686 = vmatpush1.msra.mxu0 0.0
      %1687 = vmatprep.subr.mxu0 0.0
      %1688 = vmatpush1.msra.mxu0 0.0
      %1689 = vmatprep.subr.mxu0 0.0
      %1690 = vmatpush1.msra.mxu0 0.0
      %1691 = vmatprep.subr.mxu0 0.0
      %1692 = vmatpush1.msra.mxu0 0.0
      %1693 = vmatprep.subr.mxu0 0.0
      %1694 = vmatpush1.msra.mxu0 0.0
      %1695 = vmatprep.subr.mxu0 0.0
      %1696 = vmatpush1.msra.mxu0 0.0
      %1697 = vmatprep.subr.mxu0 0.0
      %1698 = vmatpush1.msra.mxu0 0.0
      %1699 = vmatprep.subr.mxu0 0.0
      %1700 = vmatpush1.msra.mxu0 0.0
      %1701 = vmatprep.subr.mxu0 0.0
      %1702 = vmatpush1.msra.mxu0 0.0
      %1703 = vmatprep.subr.mxu0 0.0
      %1704 = vmatpush1.msra.mxu0 0.0
      %1705 = vmatprep.subr.mxu0 0.0
      %1706 = vmatpush1.msra.mxu0 0.0
      %1707 = vmatprep.subr.mxu0 0.0
      %1708 = vmatpush1.msra.mxu0 0.0
      %1709 = vmatprep.subr.mxu0 0.0
      %1710 = vmatpush1.msra.mxu0 0.0
      %1711 = vmatprep.subr.mxu0 0.0
      %1712 = vmatpush1.msra.mxu0 0.0
      %1713 = vmatprep.subr.mxu0 0.0
      %1714 = vmatpush1.msra.mxu0 0.0
      %1715 = vmatprep.subr.mxu0 0.0
      %1716 = vmatpush1.msra.mxu0 0.0
      %1717 = vmatprep.subr.mxu0 0.0
      %1718 = vmatpush1.msra.mxu0 0.0
      %1719 = vmatprep.subr.mxu0 0.0
      %1720 = vmatpush1.msra.mxu0 0.0
      %1721 = vmatprep.subr.mxu0 0.0
      %1722 = vmatpush1.msra.mxu0 0.0
      %1723 = vmatprep.subr.mxu0 0.0
      %1724 = vmatpush1.msra.mxu0 0.0
      %1725 = vmatprep.subr.mxu0 0.0
      %1726 = vmatpush1.msra.mxu0 0.0
      %1727 = vmatprep.subr.mxu0 0.0
      %1728 = vmatpush1.msra.mxu0 0.0
      %1729 = vmatprep.subr.mxu0 0.0
      %1730 = vmatpush1.msra.mxu0 0.0
      %1731 = vmatprep.subr.mxu0 0.0
      %1732 = vmatpush1.msra.mxu0 0.0
      %1733 = vmatprep.subr.mxu0 0.0
      %1734 = vmatpush1.msra.mxu0 0.0
      %1735 = vmatprep.mubr.f32.mxu0 0.0
      %1736 = vmatmul.mubr.f32.gmra.mrb[0].mxu0 %v1592
      %v1737 = vpop.f32.mrb[0].mxu0
      %v1738 = vadd.f32 0.0, %v1737
      %v1739 = vpop.f32.mrb[0].mxu0
      %1740 = vdwg.mxu0
      %v1741 = vadd.f32 %v1574, %v1667
      %v1742 = vadd.f32 %v1575, %v1669
      %v1743 = vadd.f32 %v1576, %v1738
      %1744 = vst [vmem:[%s236] sm:$0xff] %v1741
      %1745 = vst [vmem:[%s236 + $0x8] sm:$0xff] %v1742
      %vm1746 = vcmask 261120
      %1747 = vst.msk [vmem:[%s236 + $0x10] sm:$0xff] %vm1746, %v1743
      %s1748 = smul.u32 3, %s19
      %p1749 = scmp.lt.s32.totalorder %s18, 1
      %s1750 = scalar_select %p1749, %s18, 1
      %p1751 = scmp.lt.s32.totalorder %s1748, 2
      %s1752 = scalar_select %p1751, %s1748, 2
      %s1753 = smul.addr %s1750, 3
      %s1754 = sadd.s32 %s1752, %s1753
      %s1755 = smul.addr %s1754, 8
      %s1756 = scalar_lea.vmem %s3, %s1755
      // Predicated region
      $region33: #{separable_conv2d.1} parent=31 // pred_check
        %p1757 = pneg %p123
      $region34: #{separable_conv2d.1} parent=31 // pred_check_branch
        %1759 = sbr.rel (%p1757) target = $region36
      $region35: #{separable_conv2d.1} parent=31 // pred_region
        %s1760 = smul.u32 3, %s19
      $region36: #{separable_conv2d.1} parent=31 // pred_fallthru
        _
    $region32: #{separable_conv2d.1} parent=5 // pred_fallthru
      _
    %p1761 = scmp.le.s32.totalorder 2, %s9
    // Predicated region
    $region37: #{separable_conv2d.1} parent=5 // pred_check
      %p1762 = pneg %p1761
    $region38: #{separable_conv2d.1} parent=5 // pred_check_branch
      %1764 = sbr.rel (%p1762) target = $region40
    $region39: #{separable_conv2d.1} parent=5 // pred_region
      %s1765 = ssub.s32 %s9, 2
      // Predicated region
      $region41: #{separable_conv2d.1} parent=39 // pred_check
        %p1766 = pneg %p129
      $region42: #{separable_conv2d.1} parent=39 // pred_check_branch
        %1768 = sbr.rel (%p1766) target = $region44
      $region43: #{separable_conv2d.1} parent=39 // pred_region
        %s1769 = smul.u32 3, %s21
        %p1770 = scmp.lt.s32.totalorder %s20, 1
        %s1771 = scalar_select %p1770, %s20, 1
        %p1772 = scmp.lt.s32.totalorder %s1769, 2
        %s1773 = scalar_select %p1772, %s1769, 2
        %s1774 = smul.addr %s1771, 3
        %s1775 = sadd.s32 %s1773, %s1774
        %s1776 = smul.addr %s1775, 8
        %s1777 = scalar_lea.vmem %s3, %s1776
      $region44: #{separable_conv2d.1} parent=39 // pred_fallthru
        _
    $region40: #{separable_conv2d.1} parent=5 // pred_fallthru
      _
  $region6: #{separable_conv2d.1} parent=0 // loop_footer
    %s13 = sadd.s32 1, %s9
  $region7: #{separable_conv2d.1} parent=0 // loop_footer_branch
    %8 = sbr.rel target = $region3
  $region8: #{separable_conv2d.1} parent=0 // loop_exit
    _

</llo_original>
